<compile_context>
chip_gen: v7x
topology: tpu7x:2x2x1
jax: 0.10.0
libtpu: 0.0.40
codegen_flags: <defaults>
</compile_context>

<pallas_src>
import jax
import jax.numpy as jnp
from jax import lax
from jax.experimental import pallas as pl
from jax.experimental.pallas import tpu as pltpu


def entity_linear_kernel(idx_ref, emb_hbm, w_ref, b_ref, o_ref,
                         x_scratch, gather_sem):
    # idx_ref    : SMEM [B_pad]         int32  (scalar prefetch)
    # emb_hbm    : HBM  [num_ent, H]    f32    (memory_space=pl.ANY, no auto-DMA)
    # w_ref      : VMEM [TN, H]         f32    (streamed tile of W, [num_ent,H] layout)
    # b_ref      : VMEM [1, TN]         f32
    # o_ref      : VMEM [B_pad, TN]     f32
    # x_scratch  : VMEM [B_pad, H]      f32    (gathered rows, resident across N tiles)
    # gather_sem : DMA semaphores [B_pad]
    b_pad = x_scratch.shape[0]

    # Gather the B needed embedding rows from HBM exactly once (first N tile);
    # the scratch persists across the rest of the grid.  The Python loop only
    # issues DMA descriptors (scalar work), B_pad is small and static:
    # start all B copies, then wait once.
    @pl.when(pl.program_id(0) == 0)
    def _gather():
        for i in range(b_pad):
            pltpu.make_async_copy(
                emb_hbm.at[idx_ref[i]], x_scratch.at[i], gather_sem.at[i]
            ).start()
        for i in range(b_pad):
            pltpu.make_async_copy(
                emb_hbm.at[idx_ref[i]], x_scratch.at[i], gather_sem.at[i]
            ).wait()

    # x @ W.T for this N tile, contracting the H (last) dims -> no transpose
    # of W anywhere (neither in the wrapper nor in the kernel).
    acc = lax.dot_general(
        x_scratch[...], w_ref[...],
        dimension_numbers=(((1,), (1,)), ((), ())),
        preferred_element_type=jnp.float32,
    )
    o_ref[...] = (acc + b_ref[...]).astype(o_ref.dtype)


def pad_linear_params(weight, bias, tn_max=512):
    """One-time (init-side) prep: pad the num_ent axis of W / b to a multiple
    of the N tile.  Done once, so the forward pass never re-reads the full
    weight for a transpose or pad."""
    assert tn_max % 128 == 0, "N tile must be a multiple of 128 lanes"
    num_ent, _ = weight.shape
    n128 = -(-num_ent // 128) * 128
    tn = min(tn_max, n128)
    n_pad = -(-num_ent // tn) * tn
    w_pad = jnp.pad(weight, ((0, n_pad - num_ent), (0, 0)))
    b_pad = jnp.pad(bias, (0, n_pad - num_ent)).reshape(1, n_pad)
    return w_pad, b_pad, tn


def entity_linear_forward(batch_data, ent_emb, w_pad, b_pad, num_ent, tn):
    """batch_data: [B, >=1] int, ent_emb: [num_ent, H],
    w_pad: [N_pad, H], b_pad: [1, N_pad]  ->  [B, num_ent] f32."""
    B = batch_data.shape[0]
    H = ent_emb.shape[1]
    n_pad = w_pad.shape[0]
    assert n_pad % tn == 0

    b_padded = -(-B // 8) * 8  # sublane-align the batch dim

    # Clamp untrusted ids (OOB would otherwise silently read garbage), pad
    # with index 0 (valid row, results sliced away).
    idx = jnp.clip(batch_data[:, 0].astype(jnp.int32), 0, num_ent - 1)
    idx = jnp.pad(idx, (0, b_padded - B))

    grid_spec = pltpu.PrefetchScalarGridSpec(
        num_scalar_prefetch=1,
        grid=(n_pad // tn,),
        in_specs=[
            pl.BlockSpec(memory_space=pl.ANY),                    # ent_emb (HBM)
            pl.BlockSpec((tn, H), lambda j, idx_ref: (j, 0)),     # W tile
            pl.BlockSpec((1, tn), lambda j, idx_ref: (0, j)),     # bias tile
        ],
        out_specs=pl.BlockSpec((b_padded, tn), lambda j, idx_ref: (0, j)),
        scratch_shapes=[
            pltpu.VMEM((b_padded, H), ent_emb.dtype),             # gathered rows
            pltpu.SemaphoreType.DMA((b_padded,)),                 # one sem per row DMA
        ],
    )

    out = pl.pallas_call(
        entity_linear_kernel,
        out_shape=jax.ShapeDtypeStruct((b_padded, n_pad), jnp.float32),
        grid_spec=grid_spec,
        compiler_params=pltpu.CompilerParams(
            # x_scratch carries state across the N tiles (gather at tile 0),
            # so this axis must stay sequential on one core.
            dimension_semantics=("arbitrary",),
            vmem_limit_bytes=32 * 1024 * 1024,
        ),
    )(idx, ent_emb, w_pad, b_pad)

    return out[:B, :num_ent]


if __name__ == "__main__":
    # Small shapes consistent with the module; num_ent=200 exercises the
    # 128-padding path and (with tn_max=128) a 2-tile N grid; batch=6
    # exercises the batch padding to 8.
    num_ent, hidden_dim, batch = 200, 32, 6

    key = jax.random.PRNGKey(0)
    k_emb, k_w, k_b, k_idx = jax.random.split(key, 4)

    # nn.init.xavier_uniform_(ent_emb, gain=calculate_gain('relu')=sqrt(2))
    gain = jnp.sqrt(2.0)
    bound_emb = gain * jnp.sqrt(6.0 / (num_ent + hidden_dim))
    ent_emb = jax.random.uniform(
        k_emb, (num_ent, hidden_dim), jnp.float32, -bound_emb, bound_emb
    )

    # nn.Linear(hidden_dim, num_ent) default init: U(-1/sqrt(fan_in), 1/sqrt(fan_in))
    bound_lin = 1.0 / jnp.sqrt(hidden_dim)
    weight = jax.random.uniform(
        k_w, (num_ent, hidden_dim), jnp.float32, -bound_lin, bound_lin
    )
    bias = jax.random.uniform(k_b, (num_ent,), jnp.float32, -bound_lin, bound_lin)

    # batch_data: [B, 2] integer entity ids; forward only uses column 0.
    batch_data = jax.random.randint(k_idx, (batch, 2), 0, num_ent, jnp.int32)

    # One-time parameter prep (init-side), then the forward call.
    w_pad, b_pad, tn = pad_linear_params(weight, bias, tn_max=128)
    out = entity_linear_forward(batch_data, ent_emb, w_pad, b_pad, num_ent, tn)
    out = jax.block_until_ready(out)

    # Pure-JAX reference check.
    ref = ent_emb[batch_data[:, 0]] @ weight.T + bias
    assert out.shape == (batch, num_ent)
    assert jnp.allclose(out, ref, rtol=1e-5, atol=1e-5), "mismatch vs reference"

    print("KERNEL_OK")
</pallas_src>

<mosaic_0001>
module attributes {stable_mosaic.version = 11 : i64} {
  func.func @entity_linear_kernel(%arg0: i32, %arg1: memref<8xi32, #tpu.memory_space<smem>>, %arg2: memref<200x32xf32, #tpu.memory_space<any>>, %arg3: memref<128x32xf32, #tpu.memory_space<vmem>>, %arg4: memref<1x128xf32, #tpu.memory_space<vmem>>, %arg5: memref<8x128xf32, #tpu.memory_space<vmem>>, %arg6: memref<8x32xf32, #tpu.memory_space<vmem>>, %arg7: memref<8x!tpu.dma_semaphore, #tpu.memory_space<semaphore_mem>>) attributes {dimension_semantics = [#tpu.dimension_semantics<arbitrary>], iteration_bounds = array<i64: 2>, scalar_prefetch = 1 : i64, scratch_operands = 2 : i64, tpu.core_type = #tpu.core_type<tc>, window_params = [{}, {transform_indices = @transform_1, window_bounds = array<i64: 128, 32>}, {transform_indices = @transform_2, window_bounds = array<i64: 1, 128>}, {transform_indices = @transform_3, window_bounds = array<i64: 8, 128>}]} {
    %c0_i32 = arith.constant 0 : i32
    %0 = arith.cmpi eq, %arg0, %c0_i32 : i32
    %1 = arith.extui %0 : i1 to i32
    %c0_i32_0 = arith.constant 0 : i32
    %2 = arith.cmpi ne, %1, %c0_i32_0 : i32
    scf.if %2 {
      %c0_8 = arith.constant 0 : index
      %10 = memref.load %arg1[%c0_8] : memref<8xi32, #tpu.memory_space<smem>>
      %c0_i32_9 = arith.constant 0 : i32
      %c0_i32_10 = arith.constant 0 : i32
      %c0_i32_11 = arith.constant 0 : i32
      %11 = tpu.memref_slice %arg2[%10, %c0_i32_11] : memref<200x32xf32, #tpu.memory_space<any>> -> memref<1x32xf32, #tpu.memory_space<any>>
      %12 = tpu.memref_squeeze %11 : memref<1x32xf32, #tpu.memory_space<any>> -> memref<32xf32, #tpu.memory_space<any>>
      %c0_i32_12 = arith.constant 0 : i32
      %13 = tpu.memref_slice %arg6[%c0_i32_9, %c0_i32_12] : memref<8x32xf32, #tpu.memory_space<vmem>> -> memref<1x32xf32, #tpu.memory_space<vmem>>
      %14 = tpu.memref_squeeze %13 : memref<1x32xf32, #tpu.memory_space<vmem>> -> memref<32xf32, #tpu.memory_space<vmem>>
      %15 = tpu.memref_slice %arg7[%c0_i32_10] : memref<8x!tpu.dma_semaphore, #tpu.memory_space<semaphore_mem>> -> memref<1x!tpu.dma_semaphore, #tpu.memory_space<semaphore_mem>>
      %16 = tpu.memref_squeeze %15 : memref<1x!tpu.dma_semaphore, #tpu.memory_space<semaphore_mem>> -> memref<!tpu.dma_semaphore, #tpu.memory_space<semaphore_mem>>
      tpu.enqueue_dma source(%12 : memref<32xf32, #tpu.memory_space<any>>) target(%14 : memref<32xf32, #tpu.memory_space<vmem>>) target_semaphore(%16 : memref<!tpu.dma_semaphore, #tpu.memory_space<semaphore_mem>>)
      %c1 = arith.constant 1 : index
      %17 = memref.load %arg1[%c1] : memref<8xi32, #tpu.memory_space<smem>>
      %c1_i32 = arith.constant 1 : i32
      %c1_i32_13 = arith.constant 1 : i32
      %c0_i32_14 = arith.constant 0 : i32
      %18 = tpu.memref_slice %arg2[%17, %c0_i32_14] : memref<200x32xf32, #tpu.memory_space<any>> -> memref<1x32xf32, #tpu.memory_space<any>>
      %19 = tpu.memref_squeeze %18 : memref<1x32xf32, #tpu.memory_space<any>> -> memref<32xf32, #tpu.memory_space<any>>
      %c0_i32_15 = arith.constant 0 : i32
      %20 = tpu.memref_slice %arg6[%c1_i32, %c0_i32_15] : memref<8x32xf32, #tpu.memory_space<vmem>> -> memref<1x32xf32, #tpu.memory_space<vmem>>
      %21 = tpu.memref_squeeze %20 : memref<1x32xf32, #tpu.memory_space<vmem>> -> memref<32xf32, #tpu.memory_space<vmem>>
      %22 = tpu.memref_slice %arg7[%c1_i32_13] : memref<8x!tpu.dma_semaphore, #tpu.memory_space<semaphore_mem>> -> memref<1x!tpu.dma_semaphore, #tpu.memory_space<semaphore_mem>>
      %23 = tpu.memref_squeeze %22 : memref<1x!tpu.dma_semaphore, #tpu.memory_space<semaphore_mem>> -> memref<!tpu.dma_semaphore, #tpu.memory_space<semaphore_mem>>
      tpu.enqueue_dma source(%19 : memref<32xf32, #tpu.memory_space<any>>) target(%21 : memref<32xf32, #tpu.memory_space<vmem>>) target_semaphore(%23 : memref<!tpu.dma_semaphore, #tpu.memory_space<semaphore_mem>>)
      %c2 = arith.constant 2 : index
      %24 = memref.load %arg1[%c2] : memref<8xi32, #tpu.memory_space<smem>>
      %c2_i32 = arith.constant 2 : i32
      %c2_i32_16 = arith.constant 2 : i32
      %c0_i32_17 = arith.constant 0 : i32
      %25 = tpu.memref_slice %arg2[%24, %c0_i32_17] : memref<200x32xf32, #tpu.memory_space<any>> -> memref<1x32xf32, #tpu.memory_space<any>>
      %26 = tpu.memref_squeeze %25 : memref<1x32xf32, #tpu.memory_space<any>> -> memref<32xf32, #tpu.memory_space<any>>
      %c0_i32_18 = arith.constant 0 : i32
      %27 = tpu.memref_slice %arg6[%c2_i32, %c0_i32_18] : memref<8x32xf32, #tpu.memory_space<vmem>> -> memref<1x32xf32, #tpu.memory_space<vmem>>
      %28 = tpu.memref_squeeze %27 : memref<1x32xf32, #tpu.memory_space<vmem>> -> memref<32xf32, #tpu.memory_space<vmem>>
      %29 = tpu.memref_slice %arg7[%c2_i32_16] : memref<8x!tpu.dma_semaphore, #tpu.memory_space<semaphore_mem>> -> memref<1x!tpu.dma_semaphore, #tpu.memory_space<semaphore_mem>>
      %30 = tpu.memref_squeeze %29 : memref<1x!tpu.dma_semaphore, #tpu.memory_space<semaphore_mem>> -> memref<!tpu.dma_semaphore, #tpu.memory_space<semaphore_mem>>
      tpu.enqueue_dma source(%26 : memref<32xf32, #tpu.memory_space<any>>) target(%28 : memref<32xf32, #tpu.memory_space<vmem>>) target_semaphore(%30 : memref<!tpu.dma_semaphore, #tpu.memory_space<semaphore_mem>>)
      %c3 = arith.constant 3 : index
      %31 = memref.load %arg1[%c3] : memref<8xi32, #tpu.memory_space<smem>>
      %c3_i32 = arith.constant 3 : i32
      %c3_i32_19 = arith.constant 3 : i32
      %c0_i32_20 = arith.constant 0 : i32
      %32 = tpu.memref_slice %arg2[%31, %c0_i32_20] : memref<200x32xf32, #tpu.memory_space<any>> -> memref<1x32xf32, #tpu.memory_space<any>>
      %33 = tpu.memref_squeeze %32 : memref<1x32xf32, #tpu.memory_space<any>> -> memref<32xf32, #tpu.memory_space<any>>
      %c0_i32_21 = arith.constant 0 : i32
      %34 = tpu.memref_slice %arg6[%c3_i32, %c0_i32_21] : memref<8x32xf32, #tpu.memory_space<vmem>> -> memref<1x32xf32, #tpu.memory_space<vmem>>
      %35 = tpu.memref_squeeze %34 : memref<1x32xf32, #tpu.memory_space<vmem>> -> memref<32xf32, #tpu.memory_space<vmem>>
      %36 = tpu.memref_slice %arg7[%c3_i32_19] : memref<8x!tpu.dma_semaphore, #tpu.memory_space<semaphore_mem>> -> memref<1x!tpu.dma_semaphore, #tpu.memory_space<semaphore_mem>>
      %37 = tpu.memref_squeeze %36 : memref<1x!tpu.dma_semaphore, #tpu.memory_space<semaphore_mem>> -> memref<!tpu.dma_semaphore, #tpu.memory_space<semaphore_mem>>
      tpu.enqueue_dma source(%33 : memref<32xf32, #tpu.memory_space<any>>) target(%35 : memref<32xf32, #tpu.memory_space<vmem>>) target_semaphore(%37 : memref<!tpu.dma_semaphore, #tpu.memory_space<semaphore_mem>>)
      %c4 = arith.constant 4 : index
      %38 = memref.load %arg1[%c4] : memref<8xi32, #tpu.memory_space<smem>>
      %c4_i32 = arith.constant 4 : i32
      %c4_i32_22 = arith.constant 4 : i32
      %c0_i32_23 = arith.constant 0 : i32
      %39 = tpu.memref_slice %arg2[%38, %c0_i32_23] : memref<200x32xf32, #tpu.memory_space<any>> -> memref<1x32xf32, #tpu.memory_space<any>>
      %40 = tpu.memref_squeeze %39 : memref<1x32xf32, #tpu.memory_space<any>> -> memref<32xf32, #tpu.memory_space<any>>
      %c0_i32_24 = arith.constant 0 : i32
      %41 = tpu.memref_slice %arg6[%c4_i32, %c0_i32_24] : memref<8x32xf32, #tpu.memory_space<vmem>> -> memref<1x32xf32, #tpu.memory_space<vmem>>
      %42 = tpu.memref_squeeze %41 : memref<1x32xf32, #tpu.memory_space<vmem>> -> memref<32xf32, #tpu.memory_space<vmem>>
      %43 = tpu.memref_slice %arg7[%c4_i32_22] : memref<8x!tpu.dma_semaphore, #tpu.memory_space<semaphore_mem>> -> memref<1x!tpu.dma_semaphore, #tpu.memory_space<semaphore_mem>>
      %44 = tpu.memref_squeeze %43 : memref<1x!tpu.dma_semaphore, #tpu.memory_space<semaphore_mem>> -> memref<!tpu.dma_semaphore, #tpu.memory_space<semaphore_mem>>
      tpu.enqueue_dma source(%40 : memref<32xf32, #tpu.memory_space<any>>) target(%42 : memref<32xf32, #tpu.memory_space<vmem>>) target_semaphore(%44 : memref<!tpu.dma_semaphore, #tpu.memory_space<semaphore_mem>>)
      %c5 = arith.constant 5 : index
      %45 = memref.load %arg1[%c5] : memref<8xi32, #tpu.memory_space<smem>>
      %c5_i32 = arith.constant 5 : i32
      %c5_i32_25 = arith.constant 5 : i32
      %c0_i32_26 = arith.constant 0 : i32
      %46 = tpu.memref_slice %arg2[%45, %c0_i32_26] : memref<200x32xf32, #tpu.memory_space<any>> -> memref<1x32xf32, #tpu.memory_space<any>>
      %47 = tpu.memref_squeeze %46 : memref<1x32xf32, #tpu.memory_space<any>> -> memref<32xf32, #tpu.memory_space<any>>
      %c0_i32_27 = arith.constant 0 : i32
      %48 = tpu.memref_slice %arg6[%c5_i32, %c0_i32_27] : memref<8x32xf32, #tpu.memory_space<vmem>> -> memref<1x32xf32, #tpu.memory_space<vmem>>
      %49 = tpu.memref_squeeze %48 : memref<1x32xf32, #tpu.memory_space<vmem>> -> memref<32xf32, #tpu.memory_space<vmem>>
      %50 = tpu.memref_slice %arg7[%c5_i32_25] : memref<8x!tpu.dma_semaphore, #tpu.memory_space<semaphore_mem>> -> memref<1x!tpu.dma_semaphore, #tpu.memory_space<semaphore_mem>>
      %51 = tpu.memref_squeeze %50 : memref<1x!tpu.dma_semaphore, #tpu.memory_space<semaphore_mem>> -> memref<!tpu.dma_semaphore, #tpu.memory_space<semaphore_mem>>
      tpu.enqueue_dma source(%47 : memref<32xf32, #tpu.memory_space<any>>) target(%49 : memref<32xf32, #tpu.memory_space<vmem>>) target_semaphore(%51 : memref<!tpu.dma_semaphore, #tpu.memory_space<semaphore_mem>>)
      %c6 = arith.constant 6 : index
      %52 = memref.load %arg1[%c6] : memref<8xi32, #tpu.memory_space<smem>>
      %c6_i32 = arith.constant 6 : i32
      %c6_i32_28 = arith.constant 6 : i32
      %c0_i32_29 = arith.constant 0 : i32
      %53 = tpu.memref_slice %arg2[%52, %c0_i32_29] : memref<200x32xf32, #tpu.memory_space<any>> -> memref<1x32xf32, #tpu.memory_space<any>>
      %54 = tpu.memref_squeeze %53 : memref<1x32xf32, #tpu.memory_space<any>> -> memref<32xf32, #tpu.memory_space<any>>
      %c0_i32_30 = arith.constant 0 : i32
      %55 = tpu.memref_slice %arg6[%c6_i32, %c0_i32_30] : memref<8x32xf32, #tpu.memory_space<vmem>> -> memref<1x32xf32, #tpu.memory_space<vmem>>
      %56 = tpu.memref_squeeze %55 : memref<1x32xf32, #tpu.memory_space<vmem>> -> memref<32xf32, #tpu.memory_space<vmem>>
      %57 = tpu.memref_slice %arg7[%c6_i32_28] : memref<8x!tpu.dma_semaphore, #tpu.memory_space<semaphore_mem>> -> memref<1x!tpu.dma_semaphore, #tpu.memory_space<semaphore_mem>>
      %58 = tpu.memref_squeeze %57 : memref<1x!tpu.dma_semaphore, #tpu.memory_space<semaphore_mem>> -> memref<!tpu.dma_semaphore, #tpu.memory_space<semaphore_mem>>
      tpu.enqueue_dma source(%54 : memref<32xf32, #tpu.memory_space<any>>) target(%56 : memref<32xf32, #tpu.memory_space<vmem>>) target_semaphore(%58 : memref<!tpu.dma_semaphore, #tpu.memory_space<semaphore_mem>>)
      %c7 = arith.constant 7 : index
      %59 = memref.load %arg1[%c7] : memref<8xi32, #tpu.memory_space<smem>>
      %c7_i32 = arith.constant 7 : i32
      %c7_i32_31 = arith.constant 7 : i32
      %c0_i32_32 = arith.constant 0 : i32
      %60 = tpu.memref_slice %arg2[%59, %c0_i32_32] : memref<200x32xf32, #tpu.memory_space<any>> -> memref<1x32xf32, #tpu.memory_space<any>>
      %61 = tpu.memref_squeeze %60 : memref<1x32xf32, #tpu.memory_space<any>> -> memref<32xf32, #tpu.memory_space<any>>
      %c0_i32_33 = arith.constant 0 : i32
      %62 = tpu.memref_slice %arg6[%c7_i32, %c0_i32_33] : memref<8x32xf32, #tpu.memory_space<vmem>> -> memref<1x32xf32, #tpu.memory_space<vmem>>
      %63 = tpu.memref_squeeze %62 : memref<1x32xf32, #tpu.memory_space<vmem>> -> memref<32xf32, #tpu.memory_space<vmem>>
      %64 = tpu.memref_slice %arg7[%c7_i32_31] : memref<8x!tpu.dma_semaphore, #tpu.memory_space<semaphore_mem>> -> memref<1x!tpu.dma_semaphore, #tpu.memory_space<semaphore_mem>>
      %65 = tpu.memref_squeeze %64 : memref<1x!tpu.dma_semaphore, #tpu.memory_space<semaphore_mem>> -> memref<!tpu.dma_semaphore, #tpu.memory_space<semaphore_mem>>
      tpu.enqueue_dma source(%61 : memref<32xf32, #tpu.memory_space<any>>) target(%63 : memref<32xf32, #tpu.memory_space<vmem>>) target_semaphore(%65 : memref<!tpu.dma_semaphore, #tpu.memory_space<semaphore_mem>>)
      %c0_34 = arith.constant 0 : index
      %66 = memref.load %arg1[%c0_34] : memref<8xi32, #tpu.memory_space<smem>>
      %c0_i32_35 = arith.constant 0 : i32
      %c0_i32_36 = arith.constant 0 : i32
      %c0_i32_37 = arith.constant 0 : i32
      %67 = tpu.memref_slice %arg2[%66, %c0_i32_37] : memref<200x32xf32, #tpu.memory_space<any>> -> memref<1x32xf32, #tpu.memory_space<any>>
      %68 = tpu.memref_squeeze %67 : memref<1x32xf32, #tpu.memory_space<any>> -> memref<32xf32, #tpu.memory_space<any>>
      %c0_i32_38 = arith.constant 0 : i32
      %69 = tpu.memref_slice %arg6[%c0_i32_35, %c0_i32_38] : memref<8x32xf32, #tpu.memory_space<vmem>> -> memref<1x32xf32, #tpu.memory_space<vmem>>
      %70 = tpu.memref_squeeze %69 : memref<1x32xf32, #tpu.memory_space<vmem>> -> memref<32xf32, #tpu.memory_space<vmem>>
      %71 = tpu.memref_slice %arg7[%c0_i32_36] : memref<8x!tpu.dma_semaphore, #tpu.memory_space<semaphore_mem>> -> memref<1x!tpu.dma_semaphore, #tpu.memory_space<semaphore_mem>>
      %72 = tpu.memref_squeeze %71 : memref<1x!tpu.dma_semaphore, #tpu.memory_space<semaphore_mem>> -> memref<!tpu.dma_semaphore, #tpu.memory_space<semaphore_mem>>
      tpu.wait_dma2 semaphore(%72 : memref<!tpu.dma_semaphore, #tpu.memory_space<semaphore_mem>>) src(%68 : memref<32xf32, #tpu.memory_space<any>>) dst(%70 : memref<32xf32, #tpu.memory_space<vmem>>)
      %c1_39 = arith.constant 1 : index
      %73 = memref.load %arg1[%c1_39] : memref<8xi32, #tpu.memory_space<smem>>
      %c1_i32_40 = arith.constant 1 : i32
      %c1_i32_41 = arith.constant 1 : i32
      %c0_i32_42 = arith.constant 0 : i32
      %74 = tpu.memref_slice %arg2[%73, %c0_i32_42] : memref<200x32xf32, #tpu.memory_space<any>> -> memref<1x32xf32, #tpu.memory_space<any>>
      %75 = tpu.memref_squeeze %74 : memref<1x32xf32, #tpu.memory_space<any>> -> memref<32xf32, #tpu.memory_space<any>>
      %c0_i32_43 = arith.constant 0 : i32
      %76 = tpu.memref_slice %arg6[%c1_i32_40, %c0_i32_43] : memref<8x32xf32, #tpu.memory_space<vmem>> -> memref<1x32xf32, #tpu.memory_space<vmem>>
      %77 = tpu.memref_squeeze %76 : memref<1x32xf32, #tpu.memory_space<vmem>> -> memref<32xf32, #tpu.memory_space<vmem>>
      %78 = tpu.memref_slice %arg7[%c1_i32_41] : memref<8x!tpu.dma_semaphore, #tpu.memory_space<semaphore_mem>> -> memref<1x!tpu.dma_semaphore, #tpu.memory_space<semaphore_mem>>
      %79 = tpu.memref_squeeze %78 : memref<1x!tpu.dma_semaphore, #tpu.memory_space<semaphore_mem>> -> memref<!tpu.dma_semaphore, #tpu.memory_space<semaphore_mem>>
      tpu.wait_dma2 semaphore(%79 : memref<!tpu.dma_semaphore, #tpu.memory_space<semaphore_mem>>) src(%75 : memref<32xf32, #tpu.memory_space<any>>) dst(%77 : memref<32xf32, #tpu.memory_space<vmem>>)
      %c2_44 = arith.constant 2 : index
      %80 = memref.load %arg1[%c2_44] : memref<8xi32, #tpu.memory_space<smem>>
      %c2_i32_45 = arith.constant 2 : i32
      %c2_i32_46 = arith.constant 2 : i32
      %c0_i32_47 = arith.constant 0 : i32
      %81 = tpu.memref_slice %arg2[%80, %c0_i32_47] : memref<200x32xf32, #tpu.memory_space<any>> -> memref<1x32xf32, #tpu.memory_space<any>>
      %82 = tpu.memref_squeeze %81 : memref<1x32xf32, #tpu.memory_space<any>> -> memref<32xf32, #tpu.memory_space<any>>
      %c0_i32_48 = arith.constant 0 : i32
      %83 = tpu.memref_slice %arg6[%c2_i32_45, %c0_i32_48] : memref<8x32xf32, #tpu.memory_space<vmem>> -> memref<1x32xf32, #tpu.memory_space<vmem>>
      %84 = tpu.memref_squeeze %83 : memref<1x32xf32, #tpu.memory_space<vmem>> -> memref<32xf32, #tpu.memory_space<vmem>>
      %85 = tpu.memref_slice %arg7[%c2_i32_46] : memref<8x!tpu.dma_semaphore, #tpu.memory_space<semaphore_mem>> -> memref<1x!tpu.dma_semaphore, #tpu.memory_space<semaphore_mem>>
      %86 = tpu.memref_squeeze %85 : memref<1x!tpu.dma_semaphore, #tpu.memory_space<semaphore_mem>> -> memref<!tpu.dma_semaphore, #tpu.memory_space<semaphore_mem>>
      tpu.wait_dma2 semaphore(%86 : memref<!tpu.dma_semaphore, #tpu.memory_space<semaphore_mem>>) src(%82 : memref<32xf32, #tpu.memory_space<any>>) dst(%84 : memref<32xf32, #tpu.memory_space<vmem>>)
      %c3_49 = arith.constant 3 : index
      %87 = memref.load %arg1[%c3_49] : memref<8xi32, #tpu.memory_space<smem>>
      %c3_i32_50 = arith.constant 3 : i32
      %c3_i32_51 = arith.constant 3 : i32
      %c0_i32_52 = arith.constant 0 : i32
      %88 = tpu.memref_slice %arg2[%87, %c0_i32_52] : memref<200x32xf32, #tpu.memory_space<any>> -> memref<1x32xf32, #tpu.memory_space<any>>
      %89 = tpu.memref_squeeze %88 : memref<1x32xf32, #tpu.memory_space<any>> -> memref<32xf32, #tpu.memory_space<any>>
      %c0_i32_53 = arith.constant 0 : i32
      %90 = tpu.memref_slice %arg6[%c3_i32_50, %c0_i32_53] : memref<8x32xf32, #tpu.memory_space<vmem>> -> memref<1x32xf32, #tpu.memory_space<vmem>>
      %91 = tpu.memref_squeeze %90 : memref<1x32xf32, #tpu.memory_space<vmem>> -> memref<32xf32, #tpu.memory_space<vmem>>
      %92 = tpu.memref_slice %arg7[%c3_i32_51] : memref<8x!tpu.dma_semaphore, #tpu.memory_space<semaphore_mem>> -> memref<1x!tpu.dma_semaphore, #tpu.memory_space<semaphore_mem>>
      %93 = tpu.memref_squeeze %92 : memref<1x!tpu.dma_semaphore, #tpu.memory_space<semaphore_mem>> -> memref<!tpu.dma_semaphore, #tpu.memory_space<semaphore_mem>>
      tpu.wait_dma2 semaphore(%93 : memref<!tpu.dma_semaphore, #tpu.memory_space<semaphore_mem>>) src(%89 : memref<32xf32, #tpu.memory_space<any>>) dst(%91 : memref<32xf32, #tpu.memory_space<vmem>>)
      %c4_54 = arith.constant 4 : index
      %94 = memref.load %arg1[%c4_54] : memref<8xi32, #tpu.memory_space<smem>>
      %c4_i32_55 = arith.constant 4 : i32
      %c4_i32_56 = arith.constant 4 : i32
      %c0_i32_57 = arith.constant 0 : i32
      %95 = tpu.memref_slice %arg2[%94, %c0_i32_57] : memref<200x32xf32, #tpu.memory_space<any>> -> memref<1x32xf32, #tpu.memory_space<any>>
      %96 = tpu.memref_squeeze %95 : memref<1x32xf32, #tpu.memory_space<any>> -> memref<32xf32, #tpu.memory_space<any>>
      %c0_i32_58 = arith.constant 0 : i32
      %97 = tpu.memref_slice %arg6[%c4_i32_55, %c0_i32_58] : memref<8x32xf32, #tpu.memory_space<vmem>> -> memref<1x32xf32, #tpu.memory_space<vmem>>
      %98 = tpu.memref_squeeze %97 : memref<1x32xf32, #tpu.memory_space<vmem>> -> memref<32xf32, #tpu.memory_space<vmem>>
      %99 = tpu.memref_slice %arg7[%c4_i32_56] : memref<8x!tpu.dma_semaphore, #tpu.memory_space<semaphore_mem>> -> memref<1x!tpu.dma_semaphore, #tpu.memory_space<semaphore_mem>>
      %100 = tpu.memref_squeeze %99 : memref<1x!tpu.dma_semaphore, #tpu.memory_space<semaphore_mem>> -> memref<!tpu.dma_semaphore, #tpu.memory_space<semaphore_mem>>
      tpu.wait_dma2 semaphore(%100 : memref<!tpu.dma_semaphore, #tpu.memory_space<semaphore_mem>>) src(%96 : memref<32xf32, #tpu.memory_space<any>>) dst(%98 : memref<32xf32, #tpu.memory_space<vmem>>)
      %c5_59 = arith.constant 5 : index
      %101 = memref.load %arg1[%c5_59] : memref<8xi32, #tpu.memory_space<smem>>
      %c5_i32_60 = arith.constant 5 : i32
      %c5_i32_61 = arith.constant 5 : i32
      %c0_i32_62 = arith.constant 0 : i32
      %102 = tpu.memref_slice %arg2[%101, %c0_i32_62] : memref<200x32xf32, #tpu.memory_space<any>> -> memref<1x32xf32, #tpu.memory_space<any>>
      %103 = tpu.memref_squeeze %102 : memref<1x32xf32, #tpu.memory_space<any>> -> memref<32xf32, #tpu.memory_space<any>>
      %c0_i32_63 = arith.constant 0 : i32
      %104 = tpu.memref_slice %arg6[%c5_i32_60, %c0_i32_63] : memref<8x32xf32, #tpu.memory_space<vmem>> -> memref<1x32xf32, #tpu.memory_space<vmem>>
      %105 = tpu.memref_squeeze %104 : memref<1x32xf32, #tpu.memory_space<vmem>> -> memref<32xf32, #tpu.memory_space<vmem>>
      %106 = tpu.memref_slice %arg7[%c5_i32_61] : memref<8x!tpu.dma_semaphore, #tpu.memory_space<semaphore_mem>> -> memref<1x!tpu.dma_semaphore, #tpu.memory_space<semaphore_mem>>
      %107 = tpu.memref_squeeze %106 : memref<1x!tpu.dma_semaphore, #tpu.memory_space<semaphore_mem>> -> memref<!tpu.dma_semaphore, #tpu.memory_space<semaphore_mem>>
      tpu.wait_dma2 semaphore(%107 : memref<!tpu.dma_semaphore, #tpu.memory_space<semaphore_mem>>) src(%103 : memref<32xf32, #tpu.memory_space<any>>) dst(%105 : memref<32xf32, #tpu.memory_space<vmem>>)
      %c6_64 = arith.constant 6 : index
      %108 = memref.load %arg1[%c6_64] : memref<8xi32, #tpu.memory_space<smem>>
      %c6_i32_65 = arith.constant 6 : i32
      %c6_i32_66 = arith.constant 6 : i32
      %c0_i32_67 = arith.constant 0 : i32
      %109 = tpu.memref_slice %arg2[%108, %c0_i32_67] : memref<200x32xf32, #tpu.memory_space<any>> -> memref<1x32xf32, #tpu.memory_space<any>>
      %110 = tpu.memref_squeeze %109 : memref<1x32xf32, #tpu.memory_space<any>> -> memref<32xf32, #tpu.memory_space<any>>
      %c0_i32_68 = arith.constant 0 : i32
      %111 = tpu.memref_slice %arg6[%c6_i32_65, %c0_i32_68] : memref<8x32xf32, #tpu.memory_space<vmem>> -> memref<1x32xf32, #tpu.memory_space<vmem>>
      %112 = tpu.memref_squeeze %111 : memref<1x32xf32, #tpu.memory_space<vmem>> -> memref<32xf32, #tpu.memory_space<vmem>>
      %113 = tpu.memref_slice %arg7[%c6_i32_66] : memref<8x!tpu.dma_semaphore, #tpu.memory_space<semaphore_mem>> -> memref<1x!tpu.dma_semaphore, #tpu.memory_space<semaphore_mem>>
      %114 = tpu.memref_squeeze %113 : memref<1x!tpu.dma_semaphore, #tpu.memory_space<semaphore_mem>> -> memref<!tpu.dma_semaphore, #tpu.memory_space<semaphore_mem>>
      tpu.wait_dma2 semaphore(%114 : memref<!tpu.dma_semaphore, #tpu.memory_space<semaphore_mem>>) src(%110 : memref<32xf32, #tpu.memory_space<any>>) dst(%112 : memref<32xf32, #tpu.memory_space<vmem>>)
      %c7_69 = arith.constant 7 : index
      %115 = memref.load %arg1[%c7_69] : memref<8xi32, #tpu.memory_space<smem>>
      %c7_i32_70 = arith.constant 7 : i32
      %c7_i32_71 = arith.constant 7 : i32
      %c0_i32_72 = arith.constant 0 : i32
      %116 = tpu.memref_slice %arg2[%115, %c0_i32_72] : memref<200x32xf32, #tpu.memory_space<any>> -> memref<1x32xf32, #tpu.memory_space<any>>
      %117 = tpu.memref_squeeze %116 : memref<1x32xf32, #tpu.memory_space<any>> -> memref<32xf32, #tpu.memory_space<any>>
      %c0_i32_73 = arith.constant 0 : i32
      %118 = tpu.memref_slice %arg6[%c7_i32_70, %c0_i32_73] : memref<8x32xf32, #tpu.memory_space<vmem>> -> memref<1x32xf32, #tpu.memory_space<vmem>>
      %119 = tpu.memref_squeeze %118 : memref<1x32xf32, #tpu.memory_space<vmem>> -> memref<32xf32, #tpu.memory_space<vmem>>
      %120 = tpu.memref_slice %arg7[%c7_i32_71] : memref<8x!tpu.dma_semaphore, #tpu.memory_space<semaphore_mem>> -> memref<1x!tpu.dma_semaphore, #tpu.memory_space<semaphore_mem>>
      %121 = tpu.memref_squeeze %120 : memref<1x!tpu.dma_semaphore, #tpu.memory_space<semaphore_mem>> -> memref<!tpu.dma_semaphore, #tpu.memory_space<semaphore_mem>>
      tpu.wait_dma2 semaphore(%121 : memref<!tpu.dma_semaphore, #tpu.memory_space<semaphore_mem>>) src(%117 : memref<32xf32, #tpu.memory_space<any>>) dst(%119 : memref<32xf32, #tpu.memory_space<vmem>>)
    } else {
    }
    %c0 = arith.constant 0 : index
    %c0_1 = arith.constant 0 : index
    %3 = vector.load %arg6[%c0, %c0_1] : memref<8x32xf32, #tpu.memory_space<vmem>>, vector<8x32xf32>
    %c0_2 = arith.constant 0 : index
    %c0_3 = arith.constant 0 : index
    %4 = vector.load %arg3[%c0_2, %c0_3] : memref<128x32xf32, #tpu.memory_space<vmem>>, vector<128x32xf32>
    %cst = arith.constant dense<0.000000e+00> : vector<8x128xf32>
    %5 = tpu.matmul %3, %4, %cst {dimension_numbers = #tpu.dot_dimension_numbers<[1], [1], [0], [0], [0, 0, 1, 0], [], []>} : vector<8x32xf32>, vector<128x32xf32>, vector<8x128xf32> -> vector<8x128xf32>
    %c0_4 = arith.constant 0 : index
    %c0_5 = arith.constant 0 : index
    %6 = vector.load %arg4[%c0_4, %c0_5] : memref<1x128xf32, #tpu.memory_space<vmem>>, vector<1x128xf32>
    %7 = vector.broadcast %6 : vector<1x128xf32> to vector<8x128xf32>
    %8 = arith.addf %5, %7 : vector<8x128xf32>
    %c0_6 = arith.constant 0 : index
    %c0_7 = arith.constant 0 : index
    %9 = vector.load %arg5[%c0_6, %c0_7] : memref<8x128xf32, #tpu.memory_space<vmem>>, vector<8x128xf32>
    tpu.vector_store %arg5[%c0_6, %c0_7], %8 {strides = array<i32>} : memref<8x128xf32, #tpu.memory_space<vmem>>, vector<8x128xf32>,
    return
  }
  func.func @transform_1(%arg0: i32, %arg1: memref<8xi32, #tpu.memory_space<smem>>) -> (i32, i32) {
    %c0_i32 = arith.constant 0 : i32
    %c0_i32_0 = arith.constant 0 : i32
    return %arg0, %c0_i32 : i32, i32
  }
  func.func @transform_2(%arg0: i32, %arg1: memref<8xi32, #tpu.memory_space<smem>>) -> (i32, i32) {
    %c0_i32 = arith.constant 0 : i32
    %c0_i32_0 = arith.constant 0 : i32
    return %c0_i32, %arg0 : i32, i32
  }
  func.func @transform_3(%arg0: i32, %arg1: memref<8xi32, #tpu.memory_space<smem>>) -> (i32, i32) {
    %c0_i32 = arith.constant 0 : i32
    %c0_i32_0 = arith.constant 0 : i32
    return %c0_i32, %arg0 : i32, i32
  }
}

</mosaic_0001>

<llo_original>
// kernel: tpu_custom_call.1
$region0: #{tpu_custom_call.1}
  #allocation0 [shape = 'u32[]', space=smem, size = 0x4, offset = 0x4, fixed_abs, tag = 'smem constant byte address 0x4 - core index']
  #allocation1 [shape = 'u32[144,128]{1,0:T(1,128)}', space=vmem, size = 0x12000, scoped, tag = 'internal scratch']
  #allocation2 [shape = 'f32[8,32]{1,0:T(8,128)}', space=vmem, size = 0x1000, scoped, tag = 'scratch operand']
  #allocation3 [shape = 's32[8]{0}', space=sflag, size = 0x20, scoped, tag = 'scratch operand']
  #allocation4 [shape = 's32[1]{0}', space=sflag, size = 0x4, scoped, tag = 'scoped memory for tpu_custom_call.1']
  #allocation5 [shape = 'u8[512]{0}', space=smem, size = 0x200, scoped, tag = 'prefetched SMEM operand 0']
  #allocation8 [shape = 's32[]', space=sflag, size = 0x4, offset = 0, fixed_abs, tag = 'sflag constant byte address 0x0 - dummy sync flag']
  #allocation9 [shape = 's32[]', space=sflag, size = 0x4, offset = 0, fixed_abs, tag = 'sflag constant byte address 0x0 - dummy sync flag']
  #allocation10 [shape = 's32[]', space=sflag, size = 0x4, offset = 0, fixed_abs, tag = 'sflag constant byte address 0x0 - dummy sync flag']
  #allocation11 [shape = 's32[]', space=sflag, size = 0x4, offset = 0, fixed_abs, tag = 'sflag constant byte address 0x0 - dummy sync flag']
  #allocation12 [shape = 's32[]', space=sflag, size = 0x4, offset = 0, fixed_abs, tag = 'sflag constant byte address 0x0 - dummy sync flag']
  #allocation13 [shape = 's32[]', space=sflag, size = 0x4, offset = 0, fixed_abs, tag = 'sflag constant byte address 0x0 - dummy sync flag']
  #allocation14 [shape = 's32[]', space=sflag, size = 0x4, offset = 0, fixed_abs, tag = 'sflag constant byte address 0x0 - dummy sync flag']
  #allocation15 [shape = 's32[]', space=sflag, size = 0x4, offset = 0, fixed_abs, tag = 'sflag constant byte address 0x0 - dummy sync flag']
  %s0 = inlined_call_operand.vmem [shape: s32[8], index: 0, kind: input, shape index: {}]
  %s1 = inlined_call_operand.vmem [shape: f32[200,32], index: 1, kind: input, shape index: {}]
  %s2 = inlined_call_operand.vmem [shape: f32[256,32], index: 2, kind: input, shape index: {}]
  %s3 = inlined_call_operand.vmem [shape: f32[1,256], index: 3, kind: input, shape index: {}]
  %s4 = inlined_call_operand.hbm [shape: f32[8,256], index: 4, kind: output, shape index: {}]
  %s5 = sld [smem:[#allocation0]]
  $region285: #{tpu_custom_call.1} parent=0
    _
  %s7 = ssub.s32 1, %s5
  %s8 = scalar_select 0, %s7, %s5
  %s9 = sshll.u32 %s0, 4
  %s10 = int_to_ptr.vmem [resolvable:$true] %s9
  %12 = dma.vmem_to_smem %s10, 16, [#allocation5], [#allocation4]
  %13 = dma.done [#allocation4], 16
  %14 = sfence
  $region1: #{tpu_custom_call.1} parent=0
    #allocation6 [shape = 'u8[8192]{0}', space=vmem, size = 0x2000, scoped, tag = 'output window, operand 0']
    #allocation7 [shape = 's32[2]{0}', space=sflag, size = 0x8, scoped, tag = 'scoped memory for tpu_custom_call.1']
    %15 = vsyncpa [#allocation7], 0
    %s16 = scalar_lea.sflag [#allocation7], 1
    %17 = vsyncpa %s16, 0
    loop: start=0, step=1, limit=4
    $region2: #{tpu_custom_call.1} parent=1 // loop_pre_header
      _
    $region3: #{tpu_custom_call.1} parent=1 // loop_header
      %s19 = sphi 0, %s23
      %p20 = scmp.ge.s32.totalorder %s19, 4
      %s29 = sphi 0, %s31
      %s32 = sphi 0, %s29
      %s33 = sphi 0, %s32
      %s49 = sphi 0, %s33
      %s55 = sphi 0, %s57
      %s58 = sphi 0, %s55
      %s59 = sphi 0, %s58
      %s75 = sphi 0, %s59
      %s81 = sphi 0, %s83
      %s84 = sphi 0, %s81
      %s85 = sphi 0, %s84
      %s101 = sphi 0, %s85
    $region4: #{tpu_custom_call.1} parent=1 // loop_header_branch
      %22 = sbr.rel (%p20) target = $region8
    $region5: #{tpu_custom_call.1} parent=1 // loop_body
      %s24 = ssub.s32 %s19, 1
      %s25 = ssub.s32 %s19, 2
      %s26 = sadd.s32 %s19, 1
      %s27 = ssub.s32 %s19, %s26
      %p28 = scmp.eq.s32.totalorder %s27, 0
      %s30 = sadd.s32 %s29, 1
      %s31 = scalar_select %p28, %s29, %s30
      %p34 = pneg %p28
      %p35 = scmp.eq.s32.totalorder %s19, 1
      %p36 = por %p34, %p35
      %p37 = scmp.ne.s32.totalorder %s29, %s32
      %p38 = scmp.eq.s32.totalorder %s19, 0
      %p39 = por %p37, %p38
      %p40 = scmp.ne.s32.totalorder %s29, %s32
      %p41 = scmp.eq.s32.totalorder %s24, 1
      %p42 = por %p40, %p41
      %p43 = scmp.ne.s32.totalorder %s32, %s33
      %p44 = scmp.eq.s32.totalorder %s24, 0
      %p45 = por %p43, %p44
      %p46 = scmp.ne.s32.totalorder %s32, %s33
      %p47 = scmp.eq.s32.totalorder %s25, 1
      %p48 = por %p46, %p47
      %p50 = scmp.ne.s32.totalorder %s33, %s49
      %p51 = scmp.eq.s32.totalorder %s25, 0
      %p52 = por %p50, %p51
      %s53 = ssub.s32 %s19, %s26
      %p54 = scmp.eq.s32.totalorder %s53, 0
      %s56 = sadd.s32 %s55, 1
      %s57 = scalar_select %p54, %s55, %s56
      %p60 = pneg %p54
      %p61 = scmp.eq.s32.totalorder %s19, 1
      %p62 = por %p60, %p61
      %p63 = scmp.ne.s32.totalorder %s55, %s58
      %p64 = scmp.eq.s32.totalorder %s19, 0
      %p65 = por %p63, %p64
      %p66 = scmp.ne.s32.totalorder %s55, %s58
      %p67 = scmp.eq.s32.totalorder %s24, 1
      %p68 = por %p66, %p67
      %p69 = scmp.ne.s32.totalorder %s58, %s59
      %p70 = scmp.eq.s32.totalorder %s24, 0
      %p71 = por %p69, %p70
      %p72 = scmp.ne.s32.totalorder %s58, %s59
      %p73 = scmp.eq.s32.totalorder %s25, 1
      %p74 = por %p72, %p73
      %p76 = scmp.ne.s32.totalorder %s59, %s75
      %p77 = scmp.eq.s32.totalorder %s25, 0
      %p78 = por %p76, %p77
      %s79 = ssub.s32 %s19, %s26
      %p80 = scmp.eq.s32.totalorder %s79, 0
      %s82 = sadd.s32 %s81, 1
      %s83 = scalar_select %p80, %s81, %s82
      %p86 = pneg %p80
      %p87 = scmp.eq.s32.totalorder %s19, 1
      %p88 = por %p86, %p87
      %p89 = scmp.ne.s32.totalorder %s81, %s84
      %p90 = scmp.eq.s32.totalorder %s19, 0
      %p91 = por %p89, %p90
      %p92 = scmp.ne.s32.totalorder %s81, %s84
      %p93 = scmp.eq.s32.totalorder %s24, 1
      %p94 = por %p92, %p93
      %p95 = scmp.ne.s32.totalorder %s84, %s85
      %p96 = scmp.eq.s32.totalorder %s24, 0
      %p97 = por %p95, %p96
      %p98 = scmp.ne.s32.totalorder %s84, %s85
      %p99 = scmp.eq.s32.totalorder %s25, 1
      %p100 = por %p98, %p99
      %p102 = scmp.ne.s32.totalorder %s85, %s101
      %p103 = scmp.eq.s32.totalorder %s25, 0
      %p104 = por %p102, %p103
      %p105 = scmp.le.s32.totalorder 1, %s19
      %p106 = scmp.lt.s32.totalorder %s19, 3
      %p107 = pnand %p105, %p106
      %p108 = pneg %p107
      // Predicated region
      $region9: #{tpu_custom_call.1} parent=5 // pred_check
        _
      $region10: #{tpu_custom_call.1} parent=5 // pred_check_branch
        %110 = sbr.rel (%p107) target = $region12
      $region11: #{tpu_custom_call.1} parent=5 // pred_region
        %s111 = ssub.s32 %s19, 1
      $region12: #{tpu_custom_call.1} parent=5 // pred_fallthru
        _
      %p112 = scmp.lt.s32.totalorder %s19, 2
      // Predicated region
      $region13: #{tpu_custom_call.1} parent=5 // pred_check
        %p113 = pneg %p112
      $region14: #{tpu_custom_call.1} parent=5 // pred_check_branch
        %115 = sbr.rel (%p113) target = $region16
      $region15: #{tpu_custom_call.1} parent=5 // pred_region
        // Predicated region
        $region17: #{tpu_custom_call.1} parent=15 // pred_check
          %p116 = pneg %p39
        $region18: #{tpu_custom_call.1} parent=15 // pred_check_branch
          %118 = sbr.rel (%p116) target = $region20
        $region19: #{tpu_custom_call.1} parent=15 // pred_region
          %s119 = smul.u32 16, %s19
          %p120 = scmp.lt.s32.totalorder %s119, 31
          %s121 = scalar_select %p120, %s119, 31
          %s122 = smul.addr %s121, 8
          %s123 = scalar_lea.vmem %s2, %s122
          %s124 = smul.u32 16, %s19
        $region20: #{tpu_custom_call.1} parent=15 // pred_fallthru
          _
        // Predicated region
        $region21: #{tpu_custom_call.1} parent=15 // pred_check
          %p125 = pneg %p65
        $region22: #{tpu_custom_call.1} parent=15 // pred_check_branch
          %127 = sbr.rel (%p125) target = $region24
        $region23: #{tpu_custom_call.1} parent=15 // pred_region
          %p128 = scmp.lt.s32.totalorder %s19, 1
          %s129 = scalar_select %p128, %s19, 1
          %s130 = scalar_lea.vmem %s3, %s129
        $region24: #{tpu_custom_call.1} parent=15 // pred_fallthru
          _
      $region16: #{tpu_custom_call.1} parent=5 // pred_fallthru
        _
      %p131 = scmp.le.s32.totalorder 1, %s19
      %p132 = scmp.lt.s32.totalorder %s19, 3
      %p133 = pnand %p131, %p132
      %p134 = pneg %p133
      // Predicated region
      $region25: #{tpu_custom_call.1} parent=5 // pred_check
        _
      $region26: #{tpu_custom_call.1} parent=5 // pred_check_branch
        %136 = sbr.rel (%p133) target = $region28
      $region27: #{tpu_custom_call.1} parent=5 // pred_region
        %s137 = ssub.s32 %s19, 1
        %s138 = smul.u32 16, %s24
        %p139 = scmp.lt.s32.totalorder %s138, 31
        %s140 = scalar_select %p139, %s138, 31
        %s141 = smul.addr %s140, 8
        %s142 = scalar_lea.vmem %s2, %s141
        %p143 = pneg %p45
        %p144 = pneg %p42
        %p145 = scmp.lt.s32.totalorder %s24, 1
        %s146 = scalar_select %p145, %s24, 1
        %s147 = scalar_lea.vmem %s3, %s146
        %p148 = pneg %p71
        %p149 = pneg %p68
        %p150 = pneg %p97
        %p151 = pneg %p94
        %s152 = sand.u32 %s84, 1
        %s153 = scalar_lea.sflag [#allocation7], %s152
        %s154 = sand.u32 %s84, 1
        %s155 = smul.addr %s154, 8
        %s156 = scalar_lea.vmem [#allocation6], %s155
        %s157 = smul.u32 16, %s24
        %p158 = scmp.lt.s32.totalorder %s157, 31
        %s159 = scalar_select %p158, %s157, 31
        %s160 = smul.addr %s159, 8
        %s161 = scalar_lea.vmem %s2, %s160
        %s162 = smul.u32 16, %s24
        %p163 = scmp.lt.s32.totalorder %s24, 1
        %s164 = scalar_select %p163, %s24, 1
        %s165 = scalar_lea.vmem %s3, %s164
        %p166 = scmp.eq.s32.totalorder %s24, 0
        // Predicated region
        $region29: #{tpu_custom_call.1} parent=27 // pred_check
          %p167 = pneg %p166
        $region30: #{tpu_custom_call.1} parent=27 // pred_check_branch
          %169 = sbr.rel (%p167) target = $region32
        $region31: #{tpu_custom_call.1} parent=27 // pred_region
          %s170 = sld [smem:[#allocation5]]
          %s171 = scalar_lea.vmem %s1, %s170
          %p173 = scmp.lt.u32.totalorder 1, 8
          %p174 = pneg %p173
          // Predicated region
          $region33: #{tpu_custom_call.1} parent=31 // pred_check
            _
          $region34: #{tpu_custom_call.1} parent=31 // pred_check_branch
            %176 = sbr.rel (%p173) target = $region36
          $region35: #{tpu_custom_call.1} parent=31 // pred_region
            %s191 = sand.u32 1, 7
            %p192 = scmp.eq.s32.totalorder %s191, 0
            %p193 = pneg %p192
            // Predicated region
            $region48: #{tpu_custom_call.1} parent=35 // pred_check
              _
            $region49: #{tpu_custom_call.1} parent=35 // pred_check_branch
              %195 = sbr.rel (%p192) target = $region51
            $region50: #{tpu_custom_call.1} parent=35 // pred_region
              %s196 = sand.u32 1, 7
              %s197 = ssub.s32 1, %s196
              %s198 = scalar_lea.vmem %s171, %s197
              %s199 = ssub.s32 1, %s196
              %s200 = scalar_lea.vmem [#allocation2], %s199
              %s201 = sshllo.u32 0, %s196
              loop: start=0, step=1, limit=1
              $region52: #{tpu_custom_call.1} parent=50 // loop_pre_header
                _
              $region53: #{tpu_custom_call.1} parent=50 // loop_header
                %s203 = sphi 0, %s207
                %p204 = scmp.ge.s32.totalorder %s203, 1
                %s208 = sphi %s198, %s198
                %s209 = sphi %s200, %s200
              $region54: #{tpu_custom_call.1} parent=50 // loop_header_branch
                %206 = sbr.rel (%p204) target = $region58
              $region55: #{tpu_custom_call.1} parent=50 // loop_body
                %v210 = vld [vmem:[%s208] sm:%s201]
                %211 = vst [vmem:[%s209] sm:%s201] %v210
              $region56: #{tpu_custom_call.1} parent=50 // loop_footer
                %s207 = sadd.s32 1, %s203
              $region57: #{tpu_custom_call.1} parent=50 // loop_footer_branch
                %202 = sbr.rel target = $region53
              $region58: #{tpu_custom_call.1} parent=50 // loop_exit
                _
            $region51: #{tpu_custom_call.1} parent=35 // pred_fallthru
              _
          $region36: #{tpu_custom_call.1} parent=31 // pred_fallthru
            _
          // Predicated region
          $region37: #{tpu_custom_call.1} parent=31 // pred_check
            %p177 = pneg %p173
          $region38: #{tpu_custom_call.1} parent=31 // pred_check_branch
            %179 = sbr.rel (%p177) target = $region40
          $region39: #{tpu_custom_call.1} parent=31 // pred_region
            %s180 = sshllo.u32 0, 1
            loop: start=0, step=1, limit=1
            $region41: #{tpu_custom_call.1} parent=39 // loop_pre_header
              _
            $region42: #{tpu_custom_call.1} parent=39 // loop_header
              %s182 = sphi 0, %s186
              %p183 = scmp.ge.s32.totalorder %s182, 1
              %s187 = sphi %s171, %s171
              %s188 = sphi [#allocation2], [#allocation2]
            $region43: #{tpu_custom_call.1} parent=39 // loop_header_branch
              %185 = sbr.rel (%p183) target = $region47
            $region44: #{tpu_custom_call.1} parent=39 // loop_body
              %v189 = vld [vmem:[%s187] sm:%s180]
              %190 = vst [vmem:[%s188] sm:%s180] %v189
            $region45: #{tpu_custom_call.1} parent=39 // loop_footer
              %s186 = sadd.s32 1, %s182
            $region46: #{tpu_custom_call.1} parent=39 // loop_footer_branch
              %181 = sbr.rel target = $region42
            $region47: #{tpu_custom_call.1} parent=39 // loop_exit
              _
          $region40: #{tpu_custom_call.1} parent=31 // pred_fallthru
            _
          // Predicated region
          $region59: #{tpu_custom_call.1} parent=31 // pred_check
            _
          $region60: #{tpu_custom_call.1} parent=31 // pred_check_branch
            %214 = sbr.rel (0) target = $region62
          $region61: #{tpu_custom_call.1} parent=31 // pred_region
            %215 = vsyncadd [#allocation3], 16
          $region62: #{tpu_custom_call.1} parent=31 // pred_fallthru
            _
          %s216 = sld [smem:[#allocation5 + $0x1]]
          %s217 = scalar_lea.vmem %s1, %s216
          %s218 = scalar_lea.vmem [#allocation2], 1
          %s219 = scalar_lea.sflag [#allocation3], 1
          %p221 = scmp.lt.u32.totalorder 1, 8
          %p222 = pneg %p221
          // Predicated region
          $region63: #{tpu_custom_call.1} parent=31 // pred_check
            _
          $region64: #{tpu_custom_call.1} parent=31 // pred_check_branch
            %224 = sbr.rel (%p221) target = $region66
          $region65: #{tpu_custom_call.1} parent=31 // pred_region
            %s239 = sand.u32 1, 7
            %p240 = scmp.eq.s32.totalorder %s239, 0
            %p241 = pneg %p240
            // Predicated region
            $region78: #{tpu_custom_call.1} parent=65 // pred_check
              _
            $region79: #{tpu_custom_call.1} parent=65 // pred_check_branch
              %243 = sbr.rel (%p240) target = $region81
            $region80: #{tpu_custom_call.1} parent=65 // pred_region
              %s244 = sand.u32 1, 7
              %s245 = ssub.s32 1, %s244
              %s246 = scalar_lea.vmem %s217, %s245
              %s247 = ssub.s32 1, %s244
              %s248 = scalar_lea.vmem %s218, %s247 [#allocation2]
              %s249 = sshllo.u32 0, %s244
              loop: start=0, step=1, limit=1
              $region82: #{tpu_custom_call.1} parent=80 // loop_pre_header
                _
              $region83: #{tpu_custom_call.1} parent=80 // loop_header
                %s251 = sphi 0, %s255
                %p252 = scmp.ge.s32.totalorder %s251, 1
                %s256 = sphi %s246, %s246
                %s257 = sphi %s248, %s248
              $region84: #{tpu_custom_call.1} parent=80 // loop_header_branch
                %254 = sbr.rel (%p252) target = $region88
              $region85: #{tpu_custom_call.1} parent=80 // loop_body
                %v258 = vld [vmem:[%s256] sm:%s249]
                %259 = vst [vmem:[%s257] sm:%s249] %v258
              $region86: #{tpu_custom_call.1} parent=80 // loop_footer
                %s255 = sadd.s32 1, %s251
              $region87: #{tpu_custom_call.1} parent=80 // loop_footer_branch
                %250 = sbr.rel target = $region83
              $region88: #{tpu_custom_call.1} parent=80 // loop_exit
                _
            $region81: #{tpu_custom_call.1} parent=65 // pred_fallthru
              _
          $region66: #{tpu_custom_call.1} parent=31 // pred_fallthru
            _
          // Predicated region
          $region67: #{tpu_custom_call.1} parent=31 // pred_check
            %p225 = pneg %p221
          $region68: #{tpu_custom_call.1} parent=31 // pred_check_branch
            %227 = sbr.rel (%p225) target = $region70
          $region69: #{tpu_custom_call.1} parent=31 // pred_region
            %s228 = sshllo.u32 0, 1
            loop: start=0, step=1, limit=1
            $region71: #{tpu_custom_call.1} parent=69 // loop_pre_header
              _
            $region72: #{tpu_custom_call.1} parent=69 // loop_header
              %s230 = sphi 0, %s234
              %p231 = scmp.ge.s32.totalorder %s230, 1
              %s235 = sphi %s217, %s217
              %s236 = sphi %s218, %s218
            $region73: #{tpu_custom_call.1} parent=69 // loop_header_branch
              %233 = sbr.rel (%p231) target = $region77
            $region74: #{tpu_custom_call.1} parent=69 // loop_body
              %v237 = vld [vmem:[%s235] sm:%s228]
              %238 = vst [vmem:[%s236] sm:%s228] %v237
            $region75: #{tpu_custom_call.1} parent=69 // loop_footer
              %s234 = sadd.s32 1, %s230
            $region76: #{tpu_custom_call.1} parent=69 // loop_footer_branch
              %229 = sbr.rel target = $region72
            $region77: #{tpu_custom_call.1} parent=69 // loop_exit
              _
          $region70: #{tpu_custom_call.1} parent=31 // pred_fallthru
            _
          // Predicated region
          $region89: #{tpu_custom_call.1} parent=31 // pred_check
            _
          $region90: #{tpu_custom_call.1} parent=31 // pred_check_branch
            %262 = sbr.rel (0) target = $region92
          $region91: #{tpu_custom_call.1} parent=31 // pred_region
            %263 = vsyncadd %s219, 16
          $region92: #{tpu_custom_call.1} parent=31 // pred_fallthru
            _
          %s264 = sld [smem:[#allocation5 + $0x2]]
          %s265 = scalar_lea.vmem %s1, %s264
          %s266 = scalar_lea.vmem [#allocation2], 2
          %s267 = scalar_lea.sflag [#allocation3], 2
          %p269 = scmp.lt.u32.totalorder 1, 8
          %p270 = pneg %p269
          // Predicated region
          $region93: #{tpu_custom_call.1} parent=31 // pred_check
            _
          $region94: #{tpu_custom_call.1} parent=31 // pred_check_branch
            %272 = sbr.rel (%p269) target = $region96
          $region95: #{tpu_custom_call.1} parent=31 // pred_region
            %s287 = sand.u32 1, 7
            %p288 = scmp.eq.s32.totalorder %s287, 0
            %p289 = pneg %p288
            // Predicated region
            $region108: #{tpu_custom_call.1} parent=95 // pred_check
              _
            $region109: #{tpu_custom_call.1} parent=95 // pred_check_branch
              %291 = sbr.rel (%p288) target = $region111
            $region110: #{tpu_custom_call.1} parent=95 // pred_region
              %s292 = sand.u32 1, 7
              %s293 = ssub.s32 1, %s292
              %s294 = scalar_lea.vmem %s265, %s293
              %s295 = ssub.s32 1, %s292
              %s296 = scalar_lea.vmem %s266, %s295 [#allocation2]
              %s297 = sshllo.u32 0, %s292
              loop: start=0, step=1, limit=1
              $region112: #{tpu_custom_call.1} parent=110 // loop_pre_header
                _
              $region113: #{tpu_custom_call.1} parent=110 // loop_header
                %s299 = sphi 0, %s303
                %p300 = scmp.ge.s32.totalorder %s299, 1
                %s304 = sphi %s294, %s294
                %s305 = sphi %s296, %s296
              $region114: #{tpu_custom_call.1} parent=110 // loop_header_branch
                %302 = sbr.rel (%p300) target = $region118
              $region115: #{tpu_custom_call.1} parent=110 // loop_body
                %v306 = vld [vmem:[%s304] sm:%s297]
                %307 = vst [vmem:[%s305] sm:%s297] %v306
              $region116: #{tpu_custom_call.1} parent=110 // loop_footer
                %s303 = sadd.s32 1, %s299
              $region117: #{tpu_custom_call.1} parent=110 // loop_footer_branch
                %298 = sbr.rel target = $region113
              $region118: #{tpu_custom_call.1} parent=110 // loop_exit
                _
            $region111: #{tpu_custom_call.1} parent=95 // pred_fallthru
              _
          $region96: #{tpu_custom_call.1} parent=31 // pred_fallthru
            _
          // Predicated region
          $region97: #{tpu_custom_call.1} parent=31 // pred_check
            %p273 = pneg %p269
          $region98: #{tpu_custom_call.1} parent=31 // pred_check_branch
            %275 = sbr.rel (%p273) target = $region100
          $region99: #{tpu_custom_call.1} parent=31 // pred_region
            %s276 = sshllo.u32 0, 1
            loop: start=0, step=1, limit=1
            $region101: #{tpu_custom_call.1} parent=99 // loop_pre_header
              _
            $region102: #{tpu_custom_call.1} parent=99 // loop_header
              %s278 = sphi 0, %s282
              %p279 = scmp.ge.s32.totalorder %s278, 1
              %s283 = sphi %s265, %s265
              %s284 = sphi %s266, %s266
            $region103: #{tpu_custom_call.1} parent=99 // loop_header_branch
              %281 = sbr.rel (%p279) target = $region107
            $region104: #{tpu_custom_call.1} parent=99 // loop_body
              %v285 = vld [vmem:[%s283] sm:%s276]
              %286 = vst [vmem:[%s284] sm:%s276] %v285
            $region105: #{tpu_custom_call.1} parent=99 // loop_footer
              %s282 = sadd.s32 1, %s278
            $region106: #{tpu_custom_call.1} parent=99 // loop_footer_branch
              %277 = sbr.rel target = $region102
            $region107: #{tpu_custom_call.1} parent=99 // loop_exit
              _
          $region100: #{tpu_custom_call.1} parent=31 // pred_fallthru
            _
          // Predicated region
          $region119: #{tpu_custom_call.1} parent=31 // pred_check
            _
          $region120: #{tpu_custom_call.1} parent=31 // pred_check_branch
            %310 = sbr.rel (0) target = $region122
          $region121: #{tpu_custom_call.1} parent=31 // pred_region
            %311 = vsyncadd %s267, 16
          $region122: #{tpu_custom_call.1} parent=31 // pred_fallthru
            _
          %s312 = sld [smem:[#allocation5 + $0x3]]
          %s313 = scalar_lea.vmem %s1, %s312
          %s314 = scalar_lea.vmem [#allocation2], 3
          %s315 = scalar_lea.sflag [#allocation3], 3
          %p317 = scmp.lt.u32.totalorder 1, 8
          %p318 = pneg %p317
          // Predicated region
          $region123: #{tpu_custom_call.1} parent=31 // pred_check
            _
          $region124: #{tpu_custom_call.1} parent=31 // pred_check_branch
            %320 = sbr.rel (%p317) target = $region126
          $region125: #{tpu_custom_call.1} parent=31 // pred_region
            %s335 = sand.u32 1, 7
            %p336 = scmp.eq.s32.totalorder %s335, 0
            %p337 = pneg %p336
            // Predicated region
            $region138: #{tpu_custom_call.1} parent=125 // pred_check
              _
            $region139: #{tpu_custom_call.1} parent=125 // pred_check_branch
              %339 = sbr.rel (%p336) target = $region141
            $region140: #{tpu_custom_call.1} parent=125 // pred_region
              %s340 = sand.u32 1, 7
              %s341 = ssub.s32 1, %s340
              %s342 = scalar_lea.vmem %s313, %s341
              %s343 = ssub.s32 1, %s340
              %s344 = scalar_lea.vmem %s314, %s343 [#allocation2]
              %s345 = sshllo.u32 0, %s340
              loop: start=0, step=1, limit=1
              $region142: #{tpu_custom_call.1} parent=140 // loop_pre_header
                _
              $region143: #{tpu_custom_call.1} parent=140 // loop_header
                %s347 = sphi 0, %s351
                %p348 = scmp.ge.s32.totalorder %s347, 1
                %s352 = sphi %s342, %s342
                %s353 = sphi %s344, %s344
              $region144: #{tpu_custom_call.1} parent=140 // loop_header_branch
                %350 = sbr.rel (%p348) target = $region148
              $region145: #{tpu_custom_call.1} parent=140 // loop_body
                %v354 = vld [vmem:[%s352] sm:%s345]
                %355 = vst [vmem:[%s353] sm:%s345] %v354
              $region146: #{tpu_custom_call.1} parent=140 // loop_footer
                %s351 = sadd.s32 1, %s347
              $region147: #{tpu_custom_call.1} parent=140 // loop_footer_branch
                %346 = sbr.rel target = $region143
              $region148: #{tpu_custom_call.1} parent=140 // loop_exit
                _
            $region141: #{tpu_custom_call.1} parent=125 // pred_fallthru
              _
          $region126: #{tpu_custom_call.1} parent=31 // pred_fallthru
            _
          // Predicated region
          $region127: #{tpu_custom_call.1} parent=31 // pred_check
            %p321 = pneg %p317
          $region128: #{tpu_custom_call.1} parent=31 // pred_check_branch
            %323 = sbr.rel (%p321) target = $region130
          $region129: #{tpu_custom_call.1} parent=31 // pred_region
            %s324 = sshllo.u32 0, 1
            loop: start=0, step=1, limit=1
            $region131: #{tpu_custom_call.1} parent=129 // loop_pre_header
              _
            $region132: #{tpu_custom_call.1} parent=129 // loop_header
              %s326 = sphi 0, %s330
              %p327 = scmp.ge.s32.totalorder %s326, 1
              %s331 = sphi %s313, %s313
              %s332 = sphi %s314, %s314
            $region133: #{tpu_custom_call.1} parent=129 // loop_header_branch
              %329 = sbr.rel (%p327) target = $region137
            $region134: #{tpu_custom_call.1} parent=129 // loop_body
              %v333 = vld [vmem:[%s331] sm:%s324]
              %334 = vst [vmem:[%s332] sm:%s324] %v333
            $region135: #{tpu_custom_call.1} parent=129 // loop_footer
              %s330 = sadd.s32 1, %s326
            $region136: #{tpu_custom_call.1} parent=129 // loop_footer_branch
              %325 = sbr.rel target = $region132
            $region137: #{tpu_custom_call.1} parent=129 // loop_exit
              _
          $region130: #{tpu_custom_call.1} parent=31 // pred_fallthru
            _
          // Predicated region
          $region149: #{tpu_custom_call.1} parent=31 // pred_check
            _
          $region150: #{tpu_custom_call.1} parent=31 // pred_check_branch
            %358 = sbr.rel (0) target = $region152
          $region151: #{tpu_custom_call.1} parent=31 // pred_region
            %359 = vsyncadd %s315, 16
          $region152: #{tpu_custom_call.1} parent=31 // pred_fallthru
            _
          %s360 = sld [smem:[#allocation5 + $0x4]]
          %s361 = scalar_lea.vmem %s1, %s360
          %s362 = scalar_lea.vmem [#allocation2], 4
          %s363 = scalar_lea.sflag [#allocation3], 4
          %p365 = scmp.lt.u32.totalorder 1, 8
          %p366 = pneg %p365
          // Predicated region
          $region153: #{tpu_custom_call.1} parent=31 // pred_check
            _
          $region154: #{tpu_custom_call.1} parent=31 // pred_check_branch
            %368 = sbr.rel (%p365) target = $region156
          $region155: #{tpu_custom_call.1} parent=31 // pred_region
            %s383 = sand.u32 1, 7
            %p384 = scmp.eq.s32.totalorder %s383, 0
            %p385 = pneg %p384
            // Predicated region
            $region168: #{tpu_custom_call.1} parent=155 // pred_check
              _
            $region169: #{tpu_custom_call.1} parent=155 // pred_check_branch
              %387 = sbr.rel (%p384) target = $region171
            $region170: #{tpu_custom_call.1} parent=155 // pred_region
              %s388 = sand.u32 1, 7
              %s389 = ssub.s32 1, %s388
              %s390 = scalar_lea.vmem %s361, %s389
              %s391 = ssub.s32 1, %s388
              %s392 = scalar_lea.vmem %s362, %s391 [#allocation2]
              %s393 = sshllo.u32 0, %s388
              loop: start=0, step=1, limit=1
              $region172: #{tpu_custom_call.1} parent=170 // loop_pre_header
                _
              $region173: #{tpu_custom_call.1} parent=170 // loop_header
                %s395 = sphi 0, %s399
                %p396 = scmp.ge.s32.totalorder %s395, 1
                %s400 = sphi %s390, %s390
                %s401 = sphi %s392, %s392
              $region174: #{tpu_custom_call.1} parent=170 // loop_header_branch
                %398 = sbr.rel (%p396) target = $region178
              $region175: #{tpu_custom_call.1} parent=170 // loop_body
                %v402 = vld [vmem:[%s400] sm:%s393]
                %403 = vst [vmem:[%s401] sm:%s393] %v402
              $region176: #{tpu_custom_call.1} parent=170 // loop_footer
                %s399 = sadd.s32 1, %s395
              $region177: #{tpu_custom_call.1} parent=170 // loop_footer_branch
                %394 = sbr.rel target = $region173
              $region178: #{tpu_custom_call.1} parent=170 // loop_exit
                _
            $region171: #{tpu_custom_call.1} parent=155 // pred_fallthru
              _
          $region156: #{tpu_custom_call.1} parent=31 // pred_fallthru
            _
          // Predicated region
          $region157: #{tpu_custom_call.1} parent=31 // pred_check
            %p369 = pneg %p365
          $region158: #{tpu_custom_call.1} parent=31 // pred_check_branch
            %371 = sbr.rel (%p369) target = $region160
          $region159: #{tpu_custom_call.1} parent=31 // pred_region
            %s372 = sshllo.u32 0, 1
            loop: start=0, step=1, limit=1
            $region161: #{tpu_custom_call.1} parent=159 // loop_pre_header
              _
            $region162: #{tpu_custom_call.1} parent=159 // loop_header
              %s374 = sphi 0, %s378
              %p375 = scmp.ge.s32.totalorder %s374, 1
              %s379 = sphi %s361, %s361
              %s380 = sphi %s362, %s362
            $region163: #{tpu_custom_call.1} parent=159 // loop_header_branch
              %377 = sbr.rel (%p375) target = $region167
            $region164: #{tpu_custom_call.1} parent=159 // loop_body
              %v381 = vld [vmem:[%s379] sm:%s372]
              %382 = vst [vmem:[%s380] sm:%s372] %v381
            $region165: #{tpu_custom_call.1} parent=159 // loop_footer
              %s378 = sadd.s32 1, %s374
            $region166: #{tpu_custom_call.1} parent=159 // loop_footer_branch
              %373 = sbr.rel target = $region162
            $region167: #{tpu_custom_call.1} parent=159 // loop_exit
              _
          $region160: #{tpu_custom_call.1} parent=31 // pred_fallthru
            _
          // Predicated region
          $region179: #{tpu_custom_call.1} parent=31 // pred_check
            _
          $region180: #{tpu_custom_call.1} parent=31 // pred_check_branch
            %406 = sbr.rel (0) target = $region182
          $region181: #{tpu_custom_call.1} parent=31 // pred_region
            %407 = vsyncadd %s363, 16
          $region182: #{tpu_custom_call.1} parent=31 // pred_fallthru
            _
          %s408 = sld [smem:[#allocation5 + $0x5]]
          %s409 = scalar_lea.vmem %s1, %s408
          %s410 = scalar_lea.vmem [#allocation2], 5
          %s411 = scalar_lea.sflag [#allocation3], 5
          %p413 = scmp.lt.u32.totalorder 1, 8
          %p414 = pneg %p413
          // Predicated region
          $region183: #{tpu_custom_call.1} parent=31 // pred_check
            _
          $region184: #{tpu_custom_call.1} parent=31 // pred_check_branch
            %416 = sbr.rel (%p413) target = $region186
          $region185: #{tpu_custom_call.1} parent=31 // pred_region
            %s431 = sand.u32 1, 7
            %p432 = scmp.eq.s32.totalorder %s431, 0
            %p433 = pneg %p432
            // Predicated region
            $region198: #{tpu_custom_call.1} parent=185 // pred_check
              _
            $region199: #{tpu_custom_call.1} parent=185 // pred_check_branch
              %435 = sbr.rel (%p432) target = $region201
            $region200: #{tpu_custom_call.1} parent=185 // pred_region
              %s436 = sand.u32 1, 7
              %s437 = ssub.s32 1, %s436
              %s438 = scalar_lea.vmem %s409, %s437
              %s439 = ssub.s32 1, %s436
              %s440 = scalar_lea.vmem %s410, %s439 [#allocation2]
              %s441 = sshllo.u32 0, %s436
              loop: start=0, step=1, limit=1
              $region202: #{tpu_custom_call.1} parent=200 // loop_pre_header
                _
              $region203: #{tpu_custom_call.1} parent=200 // loop_header
                %s443 = sphi 0, %s447
                %p444 = scmp.ge.s32.totalorder %s443, 1
                %s448 = sphi %s438, %s438
                %s449 = sphi %s440, %s440
              $region204: #{tpu_custom_call.1} parent=200 // loop_header_branch
                %446 = sbr.rel (%p444) target = $region208
              $region205: #{tpu_custom_call.1} parent=200 // loop_body
                %v450 = vld [vmem:[%s448] sm:%s441]
                %451 = vst [vmem:[%s449] sm:%s441] %v450
              $region206: #{tpu_custom_call.1} parent=200 // loop_footer
                %s447 = sadd.s32 1, %s443
              $region207: #{tpu_custom_call.1} parent=200 // loop_footer_branch
                %442 = sbr.rel target = $region203
              $region208: #{tpu_custom_call.1} parent=200 // loop_exit
                _
            $region201: #{tpu_custom_call.1} parent=185 // pred_fallthru
              _
          $region186: #{tpu_custom_call.1} parent=31 // pred_fallthru
            _
          // Predicated region
          $region187: #{tpu_custom_call.1} parent=31 // pred_check
            %p417 = pneg %p413
          $region188: #{tpu_custom_call.1} parent=31 // pred_check_branch
            %419 = sbr.rel (%p417) target = $region190
          $region189: #{tpu_custom_call.1} parent=31 // pred_region
            %s420 = sshllo.u32 0, 1
            loop: start=0, step=1, limit=1
            $region191: #{tpu_custom_call.1} parent=189 // loop_pre_header
              _
            $region192: #{tpu_custom_call.1} parent=189 // loop_header
              %s422 = sphi 0, %s426
              %p423 = scmp.ge.s32.totalorder %s422, 1
              %s427 = sphi %s409, %s409
              %s428 = sphi %s410, %s410
            $region193: #{tpu_custom_call.1} parent=189 // loop_header_branch
              %425 = sbr.rel (%p423) target = $region197
            $region194: #{tpu_custom_call.1} parent=189 // loop_body
              %v429 = vld [vmem:[%s427] sm:%s420]
              %430 = vst [vmem:[%s428] sm:%s420] %v429
            $region195: #{tpu_custom_call.1} parent=189 // loop_footer
              %s426 = sadd.s32 1, %s422
            $region196: #{tpu_custom_call.1} parent=189 // loop_footer_branch
              %421 = sbr.rel target = $region192
            $region197: #{tpu_custom_call.1} parent=189 // loop_exit
              _
          $region190: #{tpu_custom_call.1} parent=31 // pred_fallthru
            _
          // Predicated region
          $region209: #{tpu_custom_call.1} parent=31 // pred_check
            _
          $region210: #{tpu_custom_call.1} parent=31 // pred_check_branch
            %454 = sbr.rel (0) target = $region212
          $region211: #{tpu_custom_call.1} parent=31 // pred_region
            %455 = vsyncadd %s411, 16
          $region212: #{tpu_custom_call.1} parent=31 // pred_fallthru
            _
          %s456 = sld [smem:[#allocation5 + $0x6]]
          %s457 = scalar_lea.vmem %s1, %s456
          %s458 = scalar_lea.vmem [#allocation2], 6
          %s459 = scalar_lea.sflag [#allocation3], 6
          %p461 = scmp.lt.u32.totalorder 1, 8
          %p462 = pneg %p461
          // Predicated region
          $region213: #{tpu_custom_call.1} parent=31 // pred_check
            _
          $region214: #{tpu_custom_call.1} parent=31 // pred_check_branch
            %464 = sbr.rel (%p461) target = $region216
          $region215: #{tpu_custom_call.1} parent=31 // pred_region
            %s479 = sand.u32 1, 7
            %p480 = scmp.eq.s32.totalorder %s479, 0
            %p481 = pneg %p480
            // Predicated region
            $region228: #{tpu_custom_call.1} parent=215 // pred_check
              _
            $region229: #{tpu_custom_call.1} parent=215 // pred_check_branch
              %483 = sbr.rel (%p480) target = $region231
            $region230: #{tpu_custom_call.1} parent=215 // pred_region
              %s484 = sand.u32 1, 7
              %s485 = ssub.s32 1, %s484
              %s486 = scalar_lea.vmem %s457, %s485
              %s487 = ssub.s32 1, %s484
              %s488 = scalar_lea.vmem %s458, %s487 [#allocation2]
              %s489 = sshllo.u32 0, %s484
              loop: start=0, step=1, limit=1
              $region232: #{tpu_custom_call.1} parent=230 // loop_pre_header
                _
              $region233: #{tpu_custom_call.1} parent=230 // loop_header
                %s491 = sphi 0, %s495
                %p492 = scmp.ge.s32.totalorder %s491, 1
                %s496 = sphi %s486, %s486
                %s497 = sphi %s488, %s488
              $region234: #{tpu_custom_call.1} parent=230 // loop_header_branch
                %494 = sbr.rel (%p492) target = $region238
              $region235: #{tpu_custom_call.1} parent=230 // loop_body
                %v498 = vld [vmem:[%s496] sm:%s489]
                %499 = vst [vmem:[%s497] sm:%s489] %v498
              $region236: #{tpu_custom_call.1} parent=230 // loop_footer
                %s495 = sadd.s32 1, %s491
              $region237: #{tpu_custom_call.1} parent=230 // loop_footer_branch
                %490 = sbr.rel target = $region233
              $region238: #{tpu_custom_call.1} parent=230 // loop_exit
                _
            $region231: #{tpu_custom_call.1} parent=215 // pred_fallthru
              _
          $region216: #{tpu_custom_call.1} parent=31 // pred_fallthru
            _
          // Predicated region
          $region217: #{tpu_custom_call.1} parent=31 // pred_check
            %p465 = pneg %p461
          $region218: #{tpu_custom_call.1} parent=31 // pred_check_branch
            %467 = sbr.rel (%p465) target = $region220
          $region219: #{tpu_custom_call.1} parent=31 // pred_region
            %s468 = sshllo.u32 0, 1
            loop: start=0, step=1, limit=1
            $region221: #{tpu_custom_call.1} parent=219 // loop_pre_header
              _
            $region222: #{tpu_custom_call.1} parent=219 // loop_header
              %s470 = sphi 0, %s474
              %p471 = scmp.ge.s32.totalorder %s470, 1
              %s475 = sphi %s457, %s457
              %s476 = sphi %s458, %s458
            $region223: #{tpu_custom_call.1} parent=219 // loop_header_branch
              %473 = sbr.rel (%p471) target = $region227
            $region224: #{tpu_custom_call.1} parent=219 // loop_body
              %v477 = vld [vmem:[%s475] sm:%s468]
              %478 = vst [vmem:[%s476] sm:%s468] %v477
            $region225: #{tpu_custom_call.1} parent=219 // loop_footer
              %s474 = sadd.s32 1, %s470
            $region226: #{tpu_custom_call.1} parent=219 // loop_footer_branch
              %469 = sbr.rel target = $region222
            $region227: #{tpu_custom_call.1} parent=219 // loop_exit
              _
          $region220: #{tpu_custom_call.1} parent=31 // pred_fallthru
            _
          // Predicated region
          $region239: #{tpu_custom_call.1} parent=31 // pred_check
            _
          $region240: #{tpu_custom_call.1} parent=31 // pred_check_branch
            %502 = sbr.rel (0) target = $region242
          $region241: #{tpu_custom_call.1} parent=31 // pred_region
            %503 = vsyncadd %s459, 16
          $region242: #{tpu_custom_call.1} parent=31 // pred_fallthru
            _
          %s504 = sld [smem:[#allocation5 + $0x7]]
          %s505 = scalar_lea.vmem %s1, %s504
          %s506 = scalar_lea.vmem [#allocation2], 7
          %s507 = scalar_lea.sflag [#allocation3], 7
          %p509 = scmp.lt.u32.totalorder 1, 8
          %p510 = pneg %p509
          // Predicated region
          $region243: #{tpu_custom_call.1} parent=31 // pred_check
            _
          $region244: #{tpu_custom_call.1} parent=31 // pred_check_branch
            %512 = sbr.rel (%p509) target = $region246
          $region245: #{tpu_custom_call.1} parent=31 // pred_region
            %s527 = sand.u32 1, 7
            %p528 = scmp.eq.s32.totalorder %s527, 0
            %p529 = pneg %p528
            // Predicated region
            $region258: #{tpu_custom_call.1} parent=245 // pred_check
              _
            $region259: #{tpu_custom_call.1} parent=245 // pred_check_branch
              %531 = sbr.rel (%p528) target = $region261
            $region260: #{tpu_custom_call.1} parent=245 // pred_region
              %s532 = sand.u32 1, 7
              %s533 = ssub.s32 1, %s532
              %s534 = scalar_lea.vmem %s505, %s533
              %s535 = ssub.s32 1, %s532
              %s536 = scalar_lea.vmem %s506, %s535 [#allocation2]
              %s537 = sshllo.u32 0, %s532
              loop: start=0, step=1, limit=1
              $region262: #{tpu_custom_call.1} parent=260 // loop_pre_header
                _
              $region263: #{tpu_custom_call.1} parent=260 // loop_header
                %s539 = sphi 0, %s543
                %p540 = scmp.ge.s32.totalorder %s539, 1
                %s544 = sphi %s534, %s534
                %s545 = sphi %s536, %s536
              $region264: #{tpu_custom_call.1} parent=260 // loop_header_branch
                %542 = sbr.rel (%p540) target = $region268
              $region265: #{tpu_custom_call.1} parent=260 // loop_body
                %v546 = vld [vmem:[%s544] sm:%s537]
                %547 = vst [vmem:[%s545] sm:%s537] %v546
              $region266: #{tpu_custom_call.1} parent=260 // loop_footer
                %s543 = sadd.s32 1, %s539
              $region267: #{tpu_custom_call.1} parent=260 // loop_footer_branch
                %538 = sbr.rel target = $region263
              $region268: #{tpu_custom_call.1} parent=260 // loop_exit
                _
            $region261: #{tpu_custom_call.1} parent=245 // pred_fallthru
              _
          $region246: #{tpu_custom_call.1} parent=31 // pred_fallthru
            _
          // Predicated region
          $region247: #{tpu_custom_call.1} parent=31 // pred_check
            %p513 = pneg %p509
          $region248: #{tpu_custom_call.1} parent=31 // pred_check_branch
            %515 = sbr.rel (%p513) target = $region250
          $region249: #{tpu_custom_call.1} parent=31 // pred_region
            %s516 = sshllo.u32 0, 1
            loop: start=0, step=1, limit=1
            $region251: #{tpu_custom_call.1} parent=249 // loop_pre_header
              _
            $region252: #{tpu_custom_call.1} parent=249 // loop_header
              %s518 = sphi 0, %s522
              %p519 = scmp.ge.s32.totalorder %s518, 1
              %s523 = sphi %s505, %s505
              %s524 = sphi %s506, %s506
            $region253: #{tpu_custom_call.1} parent=249 // loop_header_branch
              %521 = sbr.rel (%p519) target = $region257
            $region254: #{tpu_custom_call.1} parent=249 // loop_body
              %v525 = vld [vmem:[%s523] sm:%s516]
              %526 = vst [vmem:[%s524] sm:%s516] %v525
            $region255: #{tpu_custom_call.1} parent=249 // loop_footer
              %s522 = sadd.s32 1, %s518
            $region256: #{tpu_custom_call.1} parent=249 // loop_footer_branch
              %517 = sbr.rel target = $region252
            $region257: #{tpu_custom_call.1} parent=249 // loop_exit
              _
          $region250: #{tpu_custom_call.1} parent=31 // pred_fallthru
            _
          // Predicated region
          $region269: #{tpu_custom_call.1} parent=31 // pred_check
            _
          $region270: #{tpu_custom_call.1} parent=31 // pred_check_branch
            %550 = sbr.rel (0) target = $region272
          $region271: #{tpu_custom_call.1} parent=31 // pred_region
            %551 = vsyncadd %s507, 16
          $region272: #{tpu_custom_call.1} parent=31 // pred_fallthru
            _
          %s552 = sld [smem:[#allocation5]]
          %554 = dma.done [#allocation3], 16
          %s555 = sld [smem:[#allocation5 + $0x1]]
          %557 = dma.done %s219, 16
          %s558 = sld [smem:[#allocation5 + $0x2]]
          %560 = dma.done %s267, 16
          %s561 = sld [smem:[#allocation5 + $0x3]]
          %563 = dma.done %s315, 16
          %s564 = sld [smem:[#allocation5 + $0x4]]
          %566 = dma.done %s363, 16
          %s567 = sld [smem:[#allocation5 + $0x5]]
          %569 = dma.done %s411, 16
          %s570 = sld [smem:[#allocation5 + $0x6]]
          %572 = dma.done %s459, 16
          %s573 = sld [smem:[#allocation5 + $0x7]]
          %575 = dma.done %s507, 16
        $region32: #{tpu_custom_call.1} parent=27 // pred_fallthru
          _
        %v576 = vld [vmem:[#allocation2] sm:$0xff]
        %v577 = vld [vmem:[%s161] sm:$0xff]
        %v578 = vld [vmem:[%s161 + $0x8] sm:$0xff]
        %v579 = vld [vmem:[%s161 + $0x10] sm:$0xff]
        %v580 = vld [vmem:[%s161 + $0x18] sm:$0xff]
        %v581 = vld [vmem:[%s161 + $0x20] sm:$0xff]
        %v582 = vld [vmem:[%s161 + $0x28] sm:$0xff]
        %v583 = vld [vmem:[%s161 + $0x30] sm:$0xff]
        %v584 = vld [vmem:[%s161 + $0x38] sm:$0xff]
        %v585 = vld [vmem:[%s161 + $0x40] sm:$0xff]
        %v586 = vld [vmem:[%s161 + $0x48] sm:$0xff]
        %v587 = vld [vmem:[%s161 + $0x50] sm:$0xff]
        %v588 = vld [vmem:[%s161 + $0x58] sm:$0xff]
        %v589 = vld [vmem:[%s161 + $0x60] sm:$0xff]
        %v590 = vld [vmem:[%s161 + $0x68] sm:$0xff]
        %v591 = vld [vmem:[%s161 + $0x70] sm:$0xff]
        %v592 = vld [vmem:[%s161 + $0x78] sm:$0xff]
        %v593 = vld [vmem:[%s165] sm:$0x1]
        %v595 = vlaneseq
        %v596 = vshrl.u32 %v595, 7
        %v597 = vsub.s32 0, %v596
        %v598 = vrot.slane %v593, %v597
        %vm600 = vcmask 261120
        %v602 = vsel %vm600, %v576, 0
        %v605 = vsel %vm600, %v577, 0
        %v608 = vsel %vm600, %v578, 0
        %v611 = vsel %vm600, %v579, 0
        %v614 = vsel %vm600, %v580, 0
        %v617 = vsel %vm600, %v581, 0
        %v620 = vsel %vm600, %v582, 0
        %v623 = vsel %vm600, %v583, 0
        %v626 = vsel %vm600, %v584, 0
        %v629 = vsel %vm600, %v585, 0
        %v632 = vsel %vm600, %v586, 0
        %v635 = vsel %vm600, %v587, 0
        %v638 = vsel %vm600, %v588, 0
        %v641 = vsel %vm600, %v589, 0
        %v644 = vsel %vm600, %v590, 0
        %v647 = vsel %vm600, %v591, 0
        %v650 = vsel %vm600, %v592, 0
        %652 = vmatprep.subr.mxu0 0.0
        %653 = vmatpush1.xpose.msra.mxu0 %v605
        %654 = vmatprep.subr.mxu0 0.0
        %655 = vmatpush1.xpose.msra.mxu0 %v608
        %656 = vmatprep.subr.mxu0 0.0
        %657 = vmatpush1.xpose.msra.mxu0 %v611
        %658 = vmatprep.subr.mxu0 0.0
        %659 = vmatpush1.xpose.msra.mxu0 %v614
        %660 = vmatprep.subr.mxu0 0.0
        %661 = vmatpush1.xpose.msra.mxu0 %v617
        %662 = vmatprep.subr.mxu0 0.0
        %663 = vmatpush1.xpose.msra.mxu0 %v620
        %664 = vmatprep.subr.mxu0 0.0
        %665 = vmatpush1.xpose.msra.mxu0 %v623
        %666 = vmatprep.subr.mxu0 0.0
        %667 = vmatpush1.xpose.msra.mxu0 %v626
        %668 = vmatprep.subr.mxu0 0.0
        %669 = vmatpush1.xpose.msra.mxu0 %v629
        %670 = vmatprep.subr.mxu0 0.0
        %671 = vmatpush1.xpose.msra.mxu0 %v632
        %672 = vmatprep.subr.mxu0 0.0
        %673 = vmatpush1.xpose.msra.mxu0 %v635
        %674 = vmatprep.subr.mxu0 0.0
        %675 = vmatpush1.xpose.msra.mxu0 %v638
        %676 = vmatprep.subr.mxu0 0.0
        %677 = vmatpush1.xpose.msra.mxu0 %v641
        %678 = vmatprep.subr.mxu0 0.0
        %679 = vmatpush1.xpose.msra.mxu0 %v644
        %680 = vmatprep.subr.mxu0 0.0
        %681 = vmatpush1.xpose.msra.mxu0 %v647
        %682 = vmatprep.subr.mxu0 0.0
        %683 = vmatpush1.xpose.msra.mxu0 %v650
        %684 = vmatprep.subr.mxu0 0.0
        %685 = vmatpush1.xpose.msra.mxu0 0.0
        %686 = vmatprep.subr.mxu0 0.0
        %687 = vmatpush1.xpose.msra.mxu0 0.0
        %688 = vmatprep.subr.mxu0 0.0
        %689 = vmatpush1.xpose.msra.mxu0 0.0
        %690 = vmatprep.subr.mxu0 0.0
        %691 = vmatpush1.xpose.msra.mxu0 0.0
        %692 = vmatprep.subr.mxu0 0.0
        %693 = vmatpush1.xpose.msra.mxu0 0.0
        %694 = vmatprep.subr.mxu0 0.0
        %695 = vmatpush1.xpose.msra.mxu0 0.0
        %696 = vmatprep.subr.mxu0 0.0
        %697 = vmatpush1.xpose.msra.mxu0 0.0
        %698 = vmatprep.subr.mxu0 0.0
        %699 = vmatpush1.xpose.msra.mxu0 0.0
        %700 = vmatprep.subr.mxu0 0.0
        %701 = vmatpush1.xpose.msra.mxu0 0.0
        %702 = vmatprep.subr.mxu0 0.0
        %703 = vmatpush1.xpose.msra.mxu0 0.0
        %704 = vmatprep.subr.mxu0 0.0
        %705 = vmatpush1.xpose.msra.mxu0 0.0
        %706 = vmatprep.subr.mxu0 0.0
        %707 = vmatpush1.xpose.msra.mxu0 0.0
        %708 = vmatprep.subr.mxu0 0.0
        %709 = vmatpush1.xpose.msra.mxu0 0.0
        %710 = vmatprep.subr.mxu0 0.0
        %711 = vmatpush1.xpose.msra.mxu0 0.0
        %712 = vmatprep.subr.mxu0 0.0
        %713 = vmatpush1.xpose.msra.mxu0 0.0
        %714 = vmatprep.subr.mxu0 0.0
        %715 = vmatpush1.xpose.msra.mxu0 0.0
        %716 = vmatprep.mubr.f32.mxu0 0.0
        %717 = vmatmul.mubr.f32.gmra.mrb[0].mxu0 %v602
        %v718 = vpop.f32.mrb[0].mxu0
        %v719 = vadd.f32 %v598, %v718
        %v720 = vpop.f32.mrb[0].mxu0
        %721 = vdwg.mxu0
        %722 = vst [vmem:[%s156] sm:$0xff] %v719
        %s723 = sand.u32 %s84, 1
        %s724 = scalar_lea.sflag [#allocation7], %s723
        %s725 = sand.u32 %s84, 1
        %s726 = smul.addr %s725, 8
        %s727 = scalar_lea.vmem [#allocation6], %s726
        // Predicated region
        $region273: #{tpu_custom_call.1} parent=27 // pred_check
          %p728 = pneg %p94
        $region274: #{tpu_custom_call.1} parent=27 // pred_check_branch
          %730 = sbr.rel (%p728) target = $region276
        $region275: #{tpu_custom_call.1} parent=27 // pred_region
          %s732 = ssub.s32 128, 128
          %733 = vsyncadd %s724, %s732
          %s734 = smul.addr %s24, 128
          %s735 = scalar_lea.hbm %s4, %s734
          %s737 = sshll.u32 %s727, 4
          %s738 = int_to_ptr.vmem [resolvable:$true] %s737
          %740 = dma.vmem_to_hbm [thread:$0]  %s738, 128, %s735, %s724
        $region276: #{tpu_custom_call.1} parent=27 // pred_fallthru
          _
      $region28: #{tpu_custom_call.1} parent=5 // pred_fallthru
        _
      %p741 = scmp.le.s32.totalorder 2, %s19
      // Predicated region
      $region277: #{tpu_custom_call.1} parent=5 // pred_check
        %p742 = pneg %p741
      $region278: #{tpu_custom_call.1} parent=5 // pred_check_branch
        %744 = sbr.rel (%p742) target = $region280
      $region279: #{tpu_custom_call.1} parent=5 // pred_region
        %s745 = ssub.s32 %s19, 2
        // Predicated region
        $region281: #{tpu_custom_call.1} parent=279 // pred_check
          %p746 = pneg %p100
        $region282: #{tpu_custom_call.1} parent=279 // pred_check_branch
          %748 = sbr.rel (%p746) target = $region284
        $region283: #{tpu_custom_call.1} parent=279 // pred_region
          %s749 = sand.u32 %s85, 1
          %s750 = scalar_lea.sflag [#allocation7], %s749
          %s751 = sand.u32 %s85, 1
          %s752 = smul.addr %s751, 8
          %s753 = scalar_lea.vmem [#allocation6], %s752
          %754 = dma.done %s750, 128
        $region284: #{tpu_custom_call.1} parent=279 // pred_fallthru
          _
      $region280: #{tpu_custom_call.1} parent=5 // pred_fallthru
        _
    $region6: #{tpu_custom_call.1} parent=1 // loop_footer
      %s23 = sadd.s32 1, %s19
    $region7: #{tpu_custom_call.1} parent=1 // loop_footer_branch
      %18 = sbr.rel target = $region3
    $region8: #{tpu_custom_call.1} parent=1 // loop_exit
      _
    %755 = vsyncpa [#allocation7], 1
    %s756 = scalar_lea.sflag [#allocation7], 1
    %757 = vsyncpa %s756, 1
  %758 = vsyncmov [#allocation3]
  %s759 = vpop.sfrf %758
  %p760 = scmp.eq.s32.totalorder %s759, 0
  %p761 = pneg %p760
  %763 = shalt.err (%p761)
  %s764 = scalar_lea.sflag [#allocation3], 1
  %765 = vsyncmov %s764
  %s766 = vpop.sfrf %765
  %p767 = scmp.eq.s32.totalorder %s766, 0
  %p768 = pneg %p767
  %770 = shalt.err (%p768)
  %s771 = scalar_lea.sflag [#allocation3], 2
  %772 = vsyncmov %s771
  %s773 = vpop.sfrf %772
  %p774 = scmp.eq.s32.totalorder %s773, 0
  %p775 = pneg %p774
  %777 = shalt.err (%p775)
  %s778 = scalar_lea.sflag [#allocation3], 3
  %779 = vsyncmov %s778
  %s780 = vpop.sfrf %779
  %p781 = scmp.eq.s32.totalorder %s780, 0
  %p782 = pneg %p781
  %784 = shalt.err (%p782)
  %s785 = scalar_lea.sflag [#allocation3], 4
  %786 = vsyncmov %s785
  %s787 = vpop.sfrf %786
  %p788 = scmp.eq.s32.totalorder %s787, 0
  %p789 = pneg %p788
  %791 = shalt.err (%p789)
  %s792 = scalar_lea.sflag [#allocation3], 5
  %793 = vsyncmov %s792
  %s794 = vpop.sfrf %793
  %p795 = scmp.eq.s32.totalorder %s794, 0
  %p796 = pneg %p795
  %798 = shalt.err (%p796)
  %s799 = scalar_lea.sflag [#allocation3], 6
  %800 = vsyncmov %s799
  %s801 = vpop.sfrf %800
  %p802 = scmp.eq.s32.totalorder %s801, 0
  %p803 = pneg %p802
  %805 = shalt.err (%p803)
  %s806 = scalar_lea.sflag [#allocation3], 7
  %807 = vsyncmov %s806
  %s808 = vpop.sfrf %807
  %p809 = scmp.eq.s32.totalorder %s808, 0
  %p810 = pneg %p809
  %812 = shalt.err (%p810)

</llo_original>
